<compile_context>
chip_gen: v6e
topology: v6e:2x2x1
jax: 0.10.0
libtpu: 0.0.40
codegen_flags: <defaults>
</compile_context>

<pallas_src>
import functools

import jax
import jax.numpy as jnp
from jax.experimental import pallas as pl
from jax.experimental.pallas import tpu as pltpu

LEAKY_SLOPE = 0.01
BN_EPS = 1e-5

ENC_DIMS = lambda n_features, z_dim: [n_features, 200, 100, 50, z_dim]
DEC_DIMS = lambda n_features, z_dim: [z_dim, 50, 100, 200, n_features]


def _leaky_relu(h):
    # max(h, 0.01*h) == LeakyReLU(h) since slope > 0.
    return jnp.maximum(h, LEAKY_SLOPE * h)


def _sae_kernel(*refs, batch, n_features, pack, bf16_matmul):
    # refs layout:
    #   refs[0]     : x_packed  (B/pack, pack*nf)   [lane-dense] or (B, nf)
    #   refs[1:17]  : encoder (W, b, gamma, beta) x 4 layers
    #   refs[17:25] : decoder (W, b) x 4 layers
    #   refs[25]    : out_packed, same shape as refs[0]
    x_ref = refs[0]
    enc_refs = refs[1:17]
    dec_refs = refs[17:25]
    out_ref = refs[25]

    nf = n_features
    g = pack
    bp = batch // g

    # ---- unpack lane-dense input slab into a (B, nf) activation ----
    # Row order becomes a permutation of the batch; all layers are row-wise
    # and BN stats are permutation invariant, and the output is re-packed
    # with the same permutation, so the result is unchanged.
    if g > 1:
        xp = x_ref[...]                                   # (bp, g*nf), lane-dense
        h = jnp.concatenate(
            [xp[:, nf * r: nf * (r + 1)] for r in range(g)], axis=0)
    else:
        h = x_ref[...]

    def matmul(a, w_ref):
        w = w_ref[...]
        if bf16_matmul:
            a = a.astype(jnp.bfloat16)
            w = w.astype(jnp.bfloat16)
        return jnp.dot(a, w, preferred_element_type=jnp.float32)

    inv_b = 1.0 / float(batch)

    # ---- encoder: (Linear -> LeakyReLU -> BatchNorm1d) x 4 ----
    for layer in range(4):
        w_ref, b_ref, g_ref, beta_ref = enc_refs[4 * layer: 4 * layer + 4]

        h = matmul(h, w_ref) + b_ref[...]
        h = _leaky_relu(h)

        # Training-mode BN, two-pass (centered) biased variance.
        mean = jnp.sum(h, axis=0, keepdims=True) * inv_b
        hc = h - mean
        var = jnp.sum(hc * hc, axis=0, keepdims=True) * inv_b
        scale = g_ref[...] * jax.lax.rsqrt(var + BN_EPS)
        h = hc * scale + beta_ref[...]

    # ---- decoder: (Linear -> LeakyReLU) x 3, then Linear -> ReLU ----
    for layer in range(4):
        w_ref, b_ref = dec_refs[2 * layer: 2 * layer + 2]
        h = matmul(h, w_ref) + b_ref[...]
        h = _leaky_relu(h) if layer < 3 else jnp.maximum(h, 0.0)

    # ---- re-pack the (B, nf) output into the lane-dense slab with one
    #      dense, unmasked full-lane store ----
    if g > 1:
        out_ref[...] = jnp.concatenate(
            [h[r * bp:(r + 1) * bp, :] for r in range(g)], axis=1)
    else:
        out_ref[...] = h


def init_params(key, n_features, z_dim):
    """Deterministic PyTorch-style (uniform +-1/sqrt(fan_in)) init."""
    params = []

    def linear(key, fan_in, fan_out):
        kw, kb = jax.random.split(key)
        bound = 1.0 / jnp.sqrt(jnp.float32(fan_in))
        w = jax.random.uniform(kw, (fan_in, fan_out), jnp.float32, -bound, bound)
        b = jax.random.uniform(kb, (1, fan_out), jnp.float32, -bound, bound)
        return w, b

    enc_dims = ENC_DIMS(n_features, z_dim)
    dec_dims = DEC_DIMS(n_features, z_dim)
    keys = jax.random.split(key, 8)

    # encoder: Linear + BN(gamma=1, beta=0)
    for i in range(4):
        w, b = linear(keys[i], enc_dims[i], enc_dims[i + 1])
        gamma = jnp.ones((1, enc_dims[i + 1]), jnp.float32)
        beta = jnp.zeros((1, enc_dims[i + 1]), jnp.float32)
        params += [w, b, gamma, beta]

    # decoder: Linear only
    for i in range(4):
        w, b = linear(keys[4 + i], dec_dims[i], dec_dims[i + 1])
        params += [w, b]

    return tuple(params)


def _vmem_limit_bytes():
    """Scoped-VMEM budget off physical capacity (96 MiB on 128 MiB parts,
    ~48 MiB on v7x).  Fallback no longer under-budgets v5e/v6e."""
    phys = None
    try:
        phys = int(pltpu.get_tpu_info().vmem_capacity_bytes)
    except Exception:
        phys = None
    if not phys:
        kind = ""
        try:
            kind = jax.devices()[0].device_kind.lower()
        except Exception:
            pass
        phys = (64 << 20) if "v7" in kind else (128 << 20)
    return max(32 << 20, min(96 << 20, (phys * 3) // 4))


@functools.partial(jax.jit, static_argnames=("use_bf16_matmul",))
def george_sae_bn_forward(x, params, use_bf16_matmul=True):
    x = x.astype(jnp.float32)
    batch, nf = x.shape

    # Lane-dense packing factor for the small feature dim.
    if nf < 128 and (128 % nf == 0) and (batch % (128 // nf) == 0):
        g = 128 // nf
    else:
        g = 1
    bp = batch // g

    # Contiguous (free) reshape in XLA: (B, nf) -> (B/g, g*nf).
    x_in = x.reshape(bp, g * nf)
    args = (x_in,) + tuple(params)

    def resident_spec(a):
        nd = a.ndim
        return pl.BlockSpec(a.shape, lambda i, nd=nd: (0,) * nd)

    in_specs = [resident_spec(a) for a in args]
    out_specs = pl.BlockSpec((bp, g * nf), lambda i: (0, 0))

    # Advisory cost estimate so XLA schedules around the long custom call.
    weight_shapes = [params[4 * i].shape for i in range(4)] \
                  + [params[16 + 2 * i].shape for i in range(4)]
    flops = 2 * batch * sum(int(k) * int(n) for (k, n) in weight_shapes)
    transcendentals = sum(int(params[4 * i + 2].shape[1]) for i in range(4))
    bytes_accessed = 2 * batch * nf * 4 + sum(int(p.size) * 4 for p in params)
    cost = pl.CostEstimate(flops=flops,
                           transcendentals=transcendentals,
                           bytes_accessed=bytes_accessed)

    kernel = functools.partial(
        _sae_kernel,
        batch=batch,
        n_features=nf,
        pack=g,
        bf16_matmul=use_bf16_matmul,
    )

    out_packed = pl.pallas_call(
        kernel,
        out_shape=jax.ShapeDtypeStruct((bp, g * nf), jnp.float32),
        grid=(1,),
        in_specs=in_specs,
        out_specs=out_specs,
        compiler_params=pltpu.CompilerParams(
            dimension_semantics=("arbitrary",),
            vmem_limit_bytes=_vmem_limit_bytes(),
        ),
        cost_estimate=cost,
    )(*args)

    return out_packed.reshape(batch, nf)


def _reference_forward(x, params):
    """Pure-JAX reference (training-mode BN), for correctness checking."""
    enc = params[:16]
    dec = params[16:]
    h = x.astype(jnp.float32)
    for layer in range(4):
        w, b, gamma, beta = enc[4 * layer: 4 * layer + 4]
        h = h @ w + b
        h = jnp.where(h >= 0, h, LEAKY_SLOPE * h)
        mean = jnp.mean(h, axis=0, keepdims=True)
        var = jnp.mean((h - mean) ** 2, axis=0, keepdims=True)
        h = (h - mean) / jnp.sqrt(var + BN_EPS) * gamma + beta
    for layer in range(4):
        w, b = dec[2 * layer: 2 * layer + 2]
        h = h @ w + b
        h = jnp.where(h >= 0, h, LEAKY_SLOPE * h) if layer < 3 else jnp.maximum(h, 0.0)
    return h


if __name__ == "__main__":
    n_features = 16
    z_dim = 8
    batch = 8

    key = jax.random.PRNGKey(0)
    k_x, k_p = jax.random.split(key)

    x = jax.random.normal(k_x, (batch, n_features), jnp.float32)
    params = init_params(k_p, n_features, z_dim)

    ref = _reference_forward(x, params)

    # Default numerics mode: bf16 MXU inputs, f32 accumulation & elementwise.
    out = jax.block_until_ready(george_sae_bn_forward(x, params))
    assert out.shape == (batch, n_features), out.shape
    assert out.dtype == jnp.float32, out.dtype
    assert bool(jnp.all(out >= 0.0)), "final ReLU violated"
    assert bool(jnp.allclose(out, ref, rtol=2e-2, atol=2e-2)), "bf16 mismatch vs reference"

    # Full-f32 numerics mode (closest to the PyTorch reference).
    out_f32 = jax.block_until_ready(
        george_sae_bn_forward(x, params, use_bf16_matmul=False))
    assert bool(jnp.allclose(out_f32, ref, rtol=1e-3, atol=1e-3)), "f32 mismatch vs reference"

    print("KERNEL_OK")
</pallas_src>

<mosaic_0001>
module attributes {stable_mosaic.version = 11 : i64} {
  func.func @_sae_kernel(%arg0: i32, %arg1: memref<1x128xf32, #tpu.memory_space<vmem>>, %arg2: memref<16x200xf32, #tpu.memory_space<vmem>>, %arg3: memref<1x200xf32, #tpu.memory_space<vmem>>, %arg4: memref<1x200xf32, #tpu.memory_space<vmem>>, %arg5: memref<1x200xf32, #tpu.memory_space<vmem>>, %arg6: memref<200x100xf32, #tpu.memory_space<vmem>>, %arg7: memref<1x100xf32, #tpu.memory_space<vmem>>, %arg8: memref<1x100xf32, #tpu.memory_space<vmem>>, %arg9: memref<1x100xf32, #tpu.memory_space<vmem>>, %arg10: memref<100x50xf32, #tpu.memory_space<vmem>>, %arg11: memref<1x50xf32, #tpu.memory_space<vmem>>, %arg12: memref<1x50xf32, #tpu.memory_space<vmem>>, %arg13: memref<1x50xf32, #tpu.memory_space<vmem>>, %arg14: memref<50x8xf32, #tpu.memory_space<vmem>>, %arg15: memref<1x8xf32, #tpu.memory_space<vmem>>, %arg16: memref<1x8xf32, #tpu.memory_space<vmem>>, %arg17: memref<1x8xf32, #tpu.memory_space<vmem>>, %arg18: memref<8x50xf32, #tpu.memory_space<vmem>>, %arg19: memref<1x50xf32, #tpu.memory_space<vmem>>, %arg20: memref<50x100xf32, #tpu.memory_space<vmem>>, %arg21: memref<1x100xf32, #tpu.memory_space<vmem>>, %arg22: memref<100x200xf32, #tpu.memory_space<vmem>>, %arg23: memref<1x200xf32, #tpu.memory_space<vmem>>, %arg24: memref<200x16xf32, #tpu.memory_space<vmem>>, %arg25: memref<1x16xf32, #tpu.memory_space<vmem>>, %arg26: memref<1x128xf32, #tpu.memory_space<vmem>>) attributes {dimension_semantics = [#tpu.dimension_semantics<arbitrary>], iteration_bounds = array<i64: 1>, scalar_prefetch = 0 : i64, scratch_operands = 0 : i64, tpu.core_type = #tpu.core_type<tc>, window_params = [{pipeline_mode = #tpu.pipeline_mode<synchronous>, transform_indices = @transform_0, window_bounds = array<i64: 1, 128>}, {pipeline_mode = #tpu.pipeline_mode<synchronous>, transform_indices = @transform_1, window_bounds = array<i64: 16, 200>}, {pipeline_mode = #tpu.pipeline_mode<synchronous>, transform_indices = @transform_2, window_bounds = array<i64: 1, 200>}, {pipeline_mode = #tpu.pipeline_mode<synchronous>, transform_indices = @transform_3, window_bounds = array<i64: 1, 200>}, {pipeline_mode = #tpu.pipeline_mode<synchronous>, transform_indices = @transform_4, window_bounds = array<i64: 1, 200>}, {pipeline_mode = #tpu.pipeline_mode<synchronous>, transform_indices = @transform_5, window_bounds = array<i64: 200, 100>}, {pipeline_mode = #tpu.pipeline_mode<synchronous>, transform_indices = @transform_6, window_bounds = array<i64: 1, 100>}, {pipeline_mode = #tpu.pipeline_mode<synchronous>, transform_indices = @transform_7, window_bounds = array<i64: 1, 100>}, {pipeline_mode = #tpu.pipeline_mode<synchronous>, transform_indices = @transform_8, window_bounds = array<i64: 1, 100>}, {pipeline_mode = #tpu.pipeline_mode<synchronous>, transform_indices = @transform_9, window_bounds = array<i64: 100, 50>}, {pipeline_mode = #tpu.pipeline_mode<synchronous>, transform_indices = @transform_10, window_bounds = array<i64: 1, 50>}, {pipeline_mode = #tpu.pipeline_mode<synchronous>, transform_indices = @transform_11, window_bounds = array<i64: 1, 50>}, {pipeline_mode = #tpu.pipeline_mode<synchronous>, transform_indices = @transform_12, window_bounds = array<i64: 1, 50>}, {pipeline_mode = #tpu.pipeline_mode<synchronous>, transform_indices = @transform_13, window_bounds = array<i64: 50, 8>}, {pipeline_mode = #tpu.pipeline_mode<synchronous>, transform_indices = @transform_14, window_bounds = array<i64: 1, 8>}, {pipeline_mode = #tpu.pipeline_mode<synchronous>, transform_indices = @transform_15, window_bounds = array<i64: 1, 8>}, {pipeline_mode = #tpu.pipeline_mode<synchronous>, transform_indices = @transform_16, window_bounds = array<i64: 1, 8>}, {pipeline_mode = #tpu.pipeline_mode<synchronous>, transform_indices = @transform_17, window_bounds = array<i64: 8, 50>}, {pipeline_mode = #tpu.pipeline_mode<synchronous>, transform_indices = @transform_18, window_bounds = array<i64: 1, 50>}, {pipeline_mode = #tpu.pipeline_mode<synchronous>, transform_indices = @transform_19, window_bounds = array<i64: 50, 100>}, {pipeline_mode = #tpu.pipeline_mode<synchronous>, transform_indices = @transform_20, window_bounds = array<i64: 1, 100>}, {pipeline_mode = #tpu.pipeline_mode<synchronous>, transform_indices = @transform_21, window_bounds = array<i64: 100, 200>}, {pipeline_mode = #tpu.pipeline_mode<synchronous>, transform_indices = @transform_22, window_bounds = array<i64: 1, 200>}, {pipeline_mode = #tpu.pipeline_mode<synchronous>, transform_indices = @transform_23, window_bounds = array<i64: 200, 16>}, {pipeline_mode = #tpu.pipeline_mode<synchronous>, transform_indices = @transform_24, window_bounds = array<i64: 1, 16>}, {pipeline_mode = #tpu.pipeline_mode<synchronous>, transform_indices = @transform_25, window_bounds = array<i64: 1, 128>}]} {
    %c0 = arith.constant 0 : index
    %c0_0 = arith.constant 0 : index
    %0 = vector.load %arg1[%c0, %c0_0] : memref<1x128xf32, #tpu.memory_space<vmem>>, vector<1x128xf32>
    %1 = vector.extract_strided_slice %0 {offsets = [0, 0], sizes = [1, 16], strides = [1, 1]} : vector<1x128xf32> to vector<1x16xf32>
    %2 = vector.extract_strided_slice %0 {offsets = [0, 16], sizes = [1, 16], strides = [1, 1]} : vector<1x128xf32> to vector<1x16xf32>
    %3 = vector.extract_strided_slice %0 {offsets = [0, 32], sizes = [1, 16], strides = [1, 1]} : vector<1x128xf32> to vector<1x16xf32>
    %4 = vector.extract_strided_slice %0 {offsets = [0, 48], sizes = [1, 16], strides = [1, 1]} : vector<1x128xf32> to vector<1x16xf32>
    %5 = vector.extract_strided_slice %0 {offsets = [0, 64], sizes = [1, 16], strides = [1, 1]} : vector<1x128xf32> to vector<1x16xf32>
    %6 = vector.extract_strided_slice %0 {offsets = [0, 80], sizes = [1, 16], strides = [1, 1]} : vector<1x128xf32> to vector<1x16xf32>
    %7 = vector.extract_strided_slice %0 {offsets = [0, 96], sizes = [1, 16], strides = [1, 1]} : vector<1x128xf32> to vector<1x16xf32>
    %8 = vector.extract_strided_slice %0 {offsets = [0, 112], sizes = [1, 16], strides = [1, 1]} : vector<1x128xf32> to vector<1x16xf32>
    %9 = tpu.concatenate %1, %2, %3, %4, %5, %6, %7, %8 in 0 : vector<1x16xf32>, vector<1x16xf32>, vector<1x16xf32>, vector<1x16xf32>, vector<1x16xf32>, vector<1x16xf32>, vector<1x16xf32>, vector<1x16xf32> -> vector<8x16xf32>
    %c0_1 = arith.constant 0 : index
    %c0_2 = arith.constant 0 : index
    %10 = vector.load %arg2[%c0_1, %c0_2] : memref<16x200xf32, #tpu.memory_space<vmem>>, vector<16x200xf32>
    %11 = arith.truncf %9 : vector<8x16xf32> to vector<8x16xbf16>
    %12 = arith.truncf %10 : vector<16x200xf32> to vector<16x200xbf16>
    %cst = arith.constant dense<0.000000e+00> : vector<8x200xf32>
    %13 = tpu.matmul %11, %12, %cst {dimension_numbers = #tpu.dot_dimension_numbers<[1], [0], [0], [1], [0, 0, 1, 1], [], []>} : vector<8x16xbf16>, vector<16x200xbf16>, vector<8x200xf32> -> vector<8x200xf32>
    %c0_3 = arith.constant 0 : index
    %c0_4 = arith.constant 0 : index
    %14 = vector.load %arg3[%c0_3, %c0_4] : memref<1x200xf32, #tpu.memory_space<vmem>>, vector<1x200xf32>
    %15 = vector.broadcast %14 : vector<1x200xf32> to vector<8x200xf32>
    %16 = arith.addf %13, %15 : vector<8x200xf32>
    %cst_5 = arith.constant 0.00999999977 : f32
    %17 = vector.broadcast %cst_5 : f32 to vector<8x200xf32>
    %18 = arith.mulf %17, %16 : vector<8x200xf32>
    %19 = arith.maximumf %16, %18 : vector<8x200xf32>
    %cst_6 = arith.constant dense<0.000000e+00> : vector<200xf32>
    %20 = vector.multi_reduction <add>, %19, %cst_6 [0] : vector<8x200xf32> to vector<200xf32>
    %21 = vector.shape_cast %20 : vector<200xf32> to vector<1x200xf32>
    %cst_7 = arith.constant 1.250000e-01 : f32
    %22 = vector.broadcast %cst_7 : f32 to vector<1x200xf32>
    %23 = arith.mulf %21, %22 : vector<1x200xf32>
    %24 = vector.broadcast %23 : vector<1x200xf32> to vector<8x200xf32>
    %25 = arith.subf %19, %24 : vector<8x200xf32>
    %26 = arith.mulf %25, %25 : vector<8x200xf32>
    %cst_8 = arith.constant dense<0.000000e+00> : vector<200xf32>
    %27 = vector.multi_reduction <add>, %26, %cst_8 [0] : vector<8x200xf32> to vector<200xf32>
    %28 = vector.shape_cast %27 : vector<200xf32> to vector<1x200xf32>
    %cst_9 = arith.constant 1.250000e-01 : f32
    %29 = vector.broadcast %cst_9 : f32 to vector<1x200xf32>
    %30 = arith.mulf %28, %29 : vector<1x200xf32>
    %c0_10 = arith.constant 0 : index
    %c0_11 = arith.constant 0 : index
    %31 = vector.load %arg4[%c0_10, %c0_11] : memref<1x200xf32, #tpu.memory_space<vmem>>, vector<1x200xf32>
    %cst_12 = arith.constant 9.99999974E-6 : f32
    %32 = vector.broadcast %cst_12 : f32 to vector<1x200xf32>
    %33 = arith.addf %30, %32 : vector<1x200xf32>
    %34 = math.rsqrt %33 : vector<1x200xf32>
    %35 = arith.mulf %31, %34 : vector<1x200xf32>
    %36 = vector.broadcast %35 : vector<1x200xf32> to vector<8x200xf32>
    %37 = arith.mulf %25, %36 : vector<8x200xf32>
    %c0_13 = arith.constant 0 : index
    %c0_14 = arith.constant 0 : index
    %38 = vector.load %arg5[%c0_13, %c0_14] : memref<1x200xf32, #tpu.memory_space<vmem>>, vector<1x200xf32>
    %39 = vector.broadcast %38 : vector<1x200xf32> to vector<8x200xf32>
    %40 = arith.addf %37, %39 : vector<8x200xf32>
    %c0_15 = arith.constant 0 : index
    %c0_16 = arith.constant 0 : index
    %41 = vector.load %arg6[%c0_15, %c0_16] : memref<200x100xf32, #tpu.memory_space<vmem>>, vector<200x100xf32>
    %42 = arith.truncf %40 : vector<8x200xf32> to vector<8x200xbf16>
    %43 = arith.truncf %41 : vector<200x100xf32> to vector<200x100xbf16>
    %cst_17 = arith.constant dense<0.000000e+00> : vector<8x100xf32>
    %44 = tpu.matmul %42, %43, %cst_17 {dimension_numbers = #tpu.dot_dimension_numbers<[1], [0], [0], [1], [0, 0, 1, 1], [], []>} : vector<8x200xbf16>, vector<200x100xbf16>, vector<8x100xf32> -> vector<8x100xf32>
    %c0_18 = arith.constant 0 : index
    %c0_19 = arith.constant 0 : index
    %45 = vector.load %arg7[%c0_18, %c0_19] : memref<1x100xf32, #tpu.memory_space<vmem>>, vector<1x100xf32>
    %46 = vector.broadcast %45 : vector<1x100xf32> to vector<8x100xf32>
    %47 = arith.addf %44, %46 : vector<8x100xf32>
    %cst_20 = arith.constant 0.00999999977 : f32
    %48 = vector.broadcast %cst_20 : f32 to vector<8x100xf32>
    %49 = arith.mulf %48, %47 : vector<8x100xf32>
    %50 = arith.maximumf %47, %49 : vector<8x100xf32>
    %cst_21 = arith.constant dense<0.000000e+00> : vector<100xf32>
    %51 = vector.multi_reduction <add>, %50, %cst_21 [0] : vector<8x100xf32> to vector<100xf32>
    %52 = vector.shape_cast %51 : vector<100xf32> to vector<1x100xf32>
    %cst_22 = arith.constant 1.250000e-01 : f32
    %53 = vector.broadcast %cst_22 : f32 to vector<1x100xf32>
    %54 = arith.mulf %52, %53 : vector<1x100xf32>
    %55 = vector.broadcast %54 : vector<1x100xf32> to vector<8x100xf32>
    %56 = arith.subf %50, %55 : vector<8x100xf32>
    %57 = arith.mulf %56, %56 : vector<8x100xf32>
    %cst_23 = arith.constant dense<0.000000e+00> : vector<100xf32>
    %58 = vector.multi_reduction <add>, %57, %cst_23 [0] : vector<8x100xf32> to vector<100xf32>
    %59 = vector.shape_cast %58 : vector<100xf32> to vector<1x100xf32>
    %cst_24 = arith.constant 1.250000e-01 : f32
    %60 = vector.broadcast %cst_24 : f32 to vector<1x100xf32>
    %61 = arith.mulf %59, %60 : vector<1x100xf32>
    %c0_25 = arith.constant 0 : index
    %c0_26 = arith.constant 0 : index
    %62 = vector.load %arg8[%c0_25, %c0_26] : memref<1x100xf32, #tpu.memory_space<vmem>>, vector<1x100xf32>
    %cst_27 = arith.constant 9.99999974E-6 : f32
    %63 = vector.broadcast %cst_27 : f32 to vector<1x100xf32>
    %64 = arith.addf %61, %63 : vector<1x100xf32>
    %65 = math.rsqrt %64 : vector<1x100xf32>
    %66 = arith.mulf %62, %65 : vector<1x100xf32>
    %67 = vector.broadcast %66 : vector<1x100xf32> to vector<8x100xf32>
    %68 = arith.mulf %56, %67 : vector<8x100xf32>
    %c0_28 = arith.constant 0 : index
    %c0_29 = arith.constant 0 : index
    %69 = vector.load %arg9[%c0_28, %c0_29] : memref<1x100xf32, #tpu.memory_space<vmem>>, vector<1x100xf32>
    %70 = vector.broadcast %69 : vector<1x100xf32> to vector<8x100xf32>
    %71 = arith.addf %68, %70 : vector<8x100xf32>
    %c0_30 = arith.constant 0 : index
    %c0_31 = arith.constant 0 : index
    %72 = vector.load %arg10[%c0_30, %c0_31] : memref<100x50xf32, #tpu.memory_space<vmem>>, vector<100x50xf32>
    %73 = arith.truncf %71 : vector<8x100xf32> to vector<8x100xbf16>
    %74 = arith.truncf %72 : vector<100x50xf32> to vector<100x50xbf16>
    %cst_32 = arith.constant dense<0.000000e+00> : vector<8x50xf32>
    %75 = tpu.matmul %73, %74, %cst_32 {dimension_numbers = #tpu.dot_dimension_numbers<[1], [0], [0], [1], [0, 0, 1, 1], [], []>} : vector<8x100xbf16>, vector<100x50xbf16>, vector<8x50xf32> -> vector<8x50xf32>
    %c0_33 = arith.constant 0 : index
    %c0_34 = arith.constant 0 : index
    %76 = vector.load %arg11[%c0_33, %c0_34] : memref<1x50xf32, #tpu.memory_space<vmem>>, vector<1x50xf32>
    %77 = vector.broadcast %76 : vector<1x50xf32> to vector<8x50xf32>
    %78 = arith.addf %75, %77 : vector<8x50xf32>
    %cst_35 = arith.constant 0.00999999977 : f32
    %79 = vector.broadcast %cst_35 : f32 to vector<8x50xf32>
    %80 = arith.mulf %79, %78 : vector<8x50xf32>
    %81 = arith.maximumf %78, %80 : vector<8x50xf32>
    %cst_36 = arith.constant dense<0.000000e+00> : vector<50xf32>
    %82 = vector.multi_reduction <add>, %81, %cst_36 [0] : vector<8x50xf32> to vector<50xf32>
    %83 = vector.shape_cast %82 : vector<50xf32> to vector<1x50xf32>
    %cst_37 = arith.constant 1.250000e-01 : f32
    %84 = vector.broadcast %cst_37 : f32 to vector<1x50xf32>
    %85 = arith.mulf %83, %84 : vector<1x50xf32>
    %86 = vector.broadcast %85 : vector<1x50xf32> to vector<8x50xf32>
    %87 = arith.subf %81, %86 : vector<8x50xf32>
    %88 = arith.mulf %87, %87 : vector<8x50xf32>
    %cst_38 = arith.constant dense<0.000000e+00> : vector<50xf32>
    %89 = vector.multi_reduction <add>, %88, %cst_38 [0] : vector<8x50xf32> to vector<50xf32>
    %90 = vector.shape_cast %89 : vector<50xf32> to vector<1x50xf32>
    %cst_39 = arith.constant 1.250000e-01 : f32
    %91 = vector.broadcast %cst_39 : f32 to vector<1x50xf32>
    %92 = arith.mulf %90, %91 : vector<1x50xf32>
    %c0_40 = arith.constant 0 : index
    %c0_41 = arith.constant 0 : index
    %93 = vector.load %arg12[%c0_40, %c0_41] : memref<1x50xf32, #tpu.memory_space<vmem>>, vector<1x50xf32>
    %cst_42 = arith.constant 9.99999974E-6 : f32
    %94 = vector.broadcast %cst_42 : f32 to vector<1x50xf32>
    %95 = arith.addf %92, %94 : vector<1x50xf32>
    %96 = math.rsqrt %95 : vector<1x50xf32>
    %97 = arith.mulf %93, %96 : vector<1x50xf32>
    %98 = vector.broadcast %97 : vector<1x50xf32> to vector<8x50xf32>
    %99 = arith.mulf %87, %98 : vector<8x50xf32>
    %c0_43 = arith.constant 0 : index
    %c0_44 = arith.constant 0 : index
    %100 = vector.load %arg13[%c0_43, %c0_44] : memref<1x50xf32, #tpu.memory_space<vmem>>, vector<1x50xf32>
    %101 = vector.broadcast %100 : vector<1x50xf32> to vector<8x50xf32>
    %102 = arith.addf %99, %101 : vector<8x50xf32>
    %c0_45 = arith.constant 0 : index
    %c0_46 = arith.constant 0 : index
    %103 = vector.load %arg14[%c0_45, %c0_46] : memref<50x8xf32, #tpu.memory_space<vmem>>, vector<50x8xf32>
    %104 = arith.truncf %102 : vector<8x50xf32> to vector<8x50xbf16>
    %105 = arith.truncf %103 : vector<50x8xf32> to vector<50x8xbf16>
    %cst_47 = arith.constant dense<0.000000e+00> : vector<8x8xf32>
    %106 = tpu.matmul %104, %105, %cst_47 {dimension_numbers = #tpu.dot_dimension_numbers<[1], [0], [0], [1], [0, 0, 1, 1], [], []>} : vector<8x50xbf16>, vector<50x8xbf16>, vector<8x8xf32> -> vector<8x8xf32>
    %c0_48 = arith.constant 0 : index
    %c0_49 = arith.constant 0 : index
    %107 = vector.load %arg15[%c0_48, %c0_49] : memref<1x8xf32, #tpu.memory_space<vmem>>, vector<1x8xf32>
    %108 = vector.broadcast %107 : vector<1x8xf32> to vector<8x8xf32>
    %109 = arith.addf %106, %108 : vector<8x8xf32>
    %cst_50 = arith.constant 0.00999999977 : f32
    %110 = vector.broadcast %cst_50 : f32 to vector<8x8xf32>
    %111 = arith.mulf %110, %109 : vector<8x8xf32>
    %112 = arith.maximumf %109, %111 : vector<8x8xf32>
    %cst_51 = arith.constant dense<0.000000e+00> : vector<8xf32>
    %113 = vector.multi_reduction <add>, %112, %cst_51 [0] : vector<8x8xf32> to vector<8xf32>
    %114 = vector.shape_cast %113 : vector<8xf32> to vector<1x8xf32>
    %cst_52 = arith.constant 1.250000e-01 : f32
    %115 = vector.broadcast %cst_52 : f32 to vector<1x8xf32>
    %116 = arith.mulf %114, %115 : vector<1x8xf32>
    %117 = vector.broadcast %116 : vector<1x8xf32> to vector<8x8xf32>
    %118 = arith.subf %112, %117 : vector<8x8xf32>
    %119 = arith.mulf %118, %118 : vector<8x8xf32>
    %cst_53 = arith.constant dense<0.000000e+00> : vector<8xf32>
    %120 = vector.multi_reduction <add>, %119, %cst_53 [0] : vector<8x8xf32> to vector<8xf32>
    %121 = vector.shape_cast %120 : vector<8xf32> to vector<1x8xf32>
    %cst_54 = arith.constant 1.250000e-01 : f32
    %122 = vector.broadcast %cst_54 : f32 to vector<1x8xf32>
    %123 = arith.mulf %121, %122 : vector<1x8xf32>
    %c0_55 = arith.constant 0 : index
    %c0_56 = arith.constant 0 : index
    %124 = vector.load %arg16[%c0_55, %c0_56] : memref<1x8xf32, #tpu.memory_space<vmem>>, vector<1x8xf32>
    %cst_57 = arith.constant 9.99999974E-6 : f32
    %125 = vector.broadcast %cst_57 : f32 to vector<1x8xf32>
    %126 = arith.addf %123, %125 : vector<1x8xf32>
    %127 = math.rsqrt %126 : vector<1x8xf32>
    %128 = arith.mulf %124, %127 : vector<1x8xf32>
    %129 = vector.broadcast %128 : vector<1x8xf32> to vector<8x8xf32>
    %130 = arith.mulf %118, %129 : vector<8x8xf32>
    %c0_58 = arith.constant 0 : index
    %c0_59 = arith.constant 0 : index
    %131 = vector.load %arg17[%c0_58, %c0_59] : memref<1x8xf32, #tpu.memory_space<vmem>>, vector<1x8xf32>
    %132 = vector.broadcast %131 : vector<1x8xf32> to vector<8x8xf32>
    %133 = arith.addf %130, %132 : vector<8x8xf32>
    %c0_60 = arith.constant 0 : index
    %c0_61 = arith.constant 0 : index
    %134 = vector.load %arg18[%c0_60, %c0_61] : memref<8x50xf32, #tpu.memory_space<vmem>>, vector<8x50xf32>
    %135 = arith.truncf %133 : vector<8x8xf32> to vector<8x8xbf16>
    %136 = arith.truncf %134 : vector<8x50xf32> to vector<8x50xbf16>
    %cst_62 = arith.constant dense<0.000000e+00> : vector<8x50xf32>
    %137 = tpu.matmul %135, %136, %cst_62 {dimension_numbers = #tpu.dot_dimension_numbers<[1], [0], [0], [1], [0, 0, 1, 1], [], []>} : vector<8x8xbf16>, vector<8x50xbf16>, vector<8x50xf32> -> vector<8x50xf32>
    %c0_63 = arith.constant 0 : index
    %c0_64 = arith.constant 0 : index
    %138 = vector.load %arg19[%c0_63, %c0_64] : memref<1x50xf32, #tpu.memory_space<vmem>>, vector<1x50xf32>
    %139 = vector.broadcast %138 : vector<1x50xf32> to vector<8x50xf32>
    %140 = arith.addf %137, %139 : vector<8x50xf32>
    %cst_65 = arith.constant 0.00999999977 : f32
    %141 = vector.broadcast %cst_65 : f32 to vector<8x50xf32>
    %142 = arith.mulf %141, %140 : vector<8x50xf32>
    %143 = arith.maximumf %140, %142 : vector<8x50xf32>
    %c0_66 = arith.constant 0 : index
    %c0_67 = arith.constant 0 : index
    %144 = vector.load %arg20[%c0_66, %c0_67] : memref<50x100xf32, #tpu.memory_space<vmem>>, vector<50x100xf32>
    %145 = arith.truncf %143 : vector<8x50xf32> to vector<8x50xbf16>
    %146 = arith.truncf %144 : vector<50x100xf32> to vector<50x100xbf16>
    %cst_68 = arith.constant dense<0.000000e+00> : vector<8x100xf32>
    %147 = tpu.matmul %145, %146, %cst_68 {dimension_numbers = #tpu.dot_dimension_numbers<[1], [0], [0], [1], [0, 0, 1, 1], [], []>} : vector<8x50xbf16>, vector<50x100xbf16>, vector<8x100xf32> -> vector<8x100xf32>
    %c0_69 = arith.constant 0 : index
    %c0_70 = arith.constant 0 : index
    %148 = vector.load %arg21[%c0_69, %c0_70] : memref<1x100xf32, #tpu.memory_space<vmem>>, vector<1x100xf32>
    %149 = vector.broadcast %148 : vector<1x100xf32> to vector<8x100xf32>
    %150 = arith.addf %147, %149 : vector<8x100xf32>
    %cst_71 = arith.constant 0.00999999977 : f32
    %151 = vector.broadcast %cst_71 : f32 to vector<8x100xf32>
    %152 = arith.mulf %151, %150 : vector<8x100xf32>
    %153 = arith.maximumf %150, %152 : vector<8x100xf32>
    %c0_72 = arith.constant 0 : index
    %c0_73 = arith.constant 0 : index
    %154 = vector.load %arg22[%c0_72, %c0_73] : memref<100x200xf32, #tpu.memory_space<vmem>>, vector<100x200xf32>
    %155 = arith.truncf %153 : vector<8x100xf32> to vector<8x100xbf16>
    %156 = arith.truncf %154 : vector<100x200xf32> to vector<100x200xbf16>
    %cst_74 = arith.constant dense<0.000000e+00> : vector<8x200xf32>
    %157 = tpu.matmul %155, %156, %cst_74 {dimension_numbers = #tpu.dot_dimension_numbers<[1], [0], [0], [1], [0, 0, 1, 1], [], []>} : vector<8x100xbf16>, vector<100x200xbf16>, vector<8x200xf32> -> vector<8x200xf32>
    %c0_75 = arith.constant 0 : index
    %c0_76 = arith.constant 0 : index
    %158 = vector.load %arg23[%c0_75, %c0_76] : memref<1x200xf32, #tpu.memory_space<vmem>>, vector<1x200xf32>
    %159 = vector.broadcast %158 : vector<1x200xf32> to vector<8x200xf32>
    %160 = arith.addf %157, %159 : vector<8x200xf32>
    %cst_77 = arith.constant 0.00999999977 : f32
    %161 = vector.broadcast %cst_77 : f32 to vector<8x200xf32>
    %162 = arith.mulf %161, %160 : vector<8x200xf32>
    %163 = arith.maximumf %160, %162 : vector<8x200xf32>
    %c0_78 = arith.constant 0 : index
    %c0_79 = arith.constant 0 : index
    %164 = vector.load %arg24[%c0_78, %c0_79] : memref<200x16xf32, #tpu.memory_space<vmem>>, vector<200x16xf32>
    %165 = arith.truncf %163 : vector<8x200xf32> to vector<8x200xbf16>
    %166 = arith.truncf %164 : vector<200x16xf32> to vector<200x16xbf16>
    %cst_80 = arith.constant dense<0.000000e+00> : vector<8x16xf32>
    %167 = tpu.matmul %165, %166, %cst_80 {dimension_numbers = #tpu.dot_dimension_numbers<[1], [0], [0], [1], [0, 0, 1, 1], [], []>} : vector<8x200xbf16>, vector<200x16xbf16>, vector<8x16xf32> -> vector<8x16xf32>
    %c0_81 = arith.constant 0 : index
    %c0_82 = arith.constant 0 : index
    %168 = vector.load %arg25[%c0_81, %c0_82] : memref<1x16xf32, #tpu.memory_space<vmem>>, vector<1x16xf32>
    %169 = vector.broadcast %168 : vector<1x16xf32> to vector<8x16xf32>
    %170 = arith.addf %167, %169 : vector<8x16xf32>
    %cst_83 = arith.constant 0.000000e+00 : f32
    %171 = vector.broadcast %cst_83 : f32 to vector<8x16xf32>
    %172 = arith.maximumf %170, %171 : vector<8x16xf32>
    %173 = vector.extract_strided_slice %172 {offsets = [0, 0], sizes = [1, 16], strides = [1, 1]} : vector<8x16xf32> to vector<1x16xf32>
    %174 = vector.extract_strided_slice %172 {offsets = [1, 0], sizes = [1, 16], strides = [1, 1]} : vector<8x16xf32> to vector<1x16xf32>
    %175 = vector.extract_strided_slice %172 {offsets = [2, 0], sizes = [1, 16], strides = [1, 1]} : vector<8x16xf32> to vector<1x16xf32>
    %176 = vector.extract_strided_slice %172 {offsets = [3, 0], sizes = [1, 16], strides = [1, 1]} : vector<8x16xf32> to vector<1x16xf32>
    %177 = vector.extract_strided_slice %172 {offsets = [4, 0], sizes = [1, 16], strides = [1, 1]} : vector<8x16xf32> to vector<1x16xf32>
    %178 = vector.extract_strided_slice %172 {offsets = [5, 0], sizes = [1, 16], strides = [1, 1]} : vector<8x16xf32> to vector<1x16xf32>
    %179 = vector.extract_strided_slice %172 {offsets = [6, 0], sizes = [1, 16], strides = [1, 1]} : vector<8x16xf32> to vector<1x16xf32>
    %180 = vector.extract_strided_slice %172 {offsets = [7, 0], sizes = [1, 16], strides = [1, 1]} : vector<8x16xf32> to vector<1x16xf32>
    %181 = tpu.concatenate %173, %174, %175, %176, %177, %178, %179, %180 in 1 : vector<1x16xf32>, vector<1x16xf32>, vector<1x16xf32>, vector<1x16xf32>, vector<1x16xf32>, vector<1x16xf32>, vector<1x16xf32>, vector<1x16xf32> -> vector<1x128xf32>
    %c0_84 = arith.constant 0 : index
    %c0_85 = arith.constant 0 : index
    %182 = vector.load %arg26[%c0_84, %c0_85] : memref<1x128xf32, #tpu.memory_space<vmem>>, vector<1x128xf32>
    tpu.vector_store %arg26[%c0_84, %c0_85], %181 {strides = array<i32>} : memref<1x128xf32, #tpu.memory_space<vmem>>, vector<1x128xf32>,
    return
  }
  func.func @transform_0(%arg0: i32) -> (i32, i32) {
    %c0_i32 = arith.constant 0 : i32
    %c0_i32_0 = arith.constant 0 : i32
    %c0_i32_1 = arith.constant 0 : i32
    return %c0_i32, %c0_i32_0 : i32, i32
  }
  func.func @transform_1(%arg0: i32) -> (i32, i32) {
    %c0_i32 = arith.constant 0 : i32
    %c0_i32_0 = arith.constant 0 : i32
    %c0_i32_1 = arith.constant 0 : i32
    return %c0_i32, %c0_i32_0 : i32, i32
  }
  func.func @transform_2(%arg0: i32) -> (i32, i32) {
    %c0_i32 = arith.constant 0 : i32
    %c0_i32_0 = arith.constant 0 : i32
    %c0_i32_1 = arith.constant 0 : i32
    return %c0_i32, %c0_i32_0 : i32, i32
  }
  func.func @transform_3(%arg0: i32) -> (i32, i32) {
    %c0_i32 = arith.constant 0 : i32
    %c0_i32_0 = arith.constant 0 : i32
    %c0_i32_1 = arith.constant 0 : i32
    return %c0_i32, %c0_i32_0 : i32, i32
  }
  func.func @transform_4(%arg0: i32) -> (i32, i32) {
    %c0_i32 = arith.constant 0 : i32
    %c0_i32_0 = arith.constant 0 : i32
    %c0_i32_1 = arith.constant 0 : i32
    return %c0_i32, %c0_i32_0 : i32, i32
  }
  func.func @transform_5(%arg0: i32) -> (i32, i32) {
    %c0_i32 = arith.constant 0 : i32
    %c0_i32_0 = arith.constant 0 : i32
    %c0_i32_1 = arith.constant 0 : i32
    return %c0_i32, %c0_i32_0 : i32, i32
  }
  func.func @transform_6(%arg0: i32) -> (i32, i32) {
    %c0_i32 = arith.constant 0 : i32
    %c0_i32_0 = arith.constant 0 : i32
    %c0_i32_1 = arith.constant 0 : i32
    return %c0_i32, %c0_i32_0 : i32, i32
  }
  func.func @transform_7(%arg0: i32) -> (i32, i32) {
    %c0_i32 = arith.constant 0 : i32
    %c0_i32_0 = arith.constant 0 : i32
    %c0_i32_1 = arith.constant 0 : i32
    return %c0_i32, %c0_i32_0 : i32, i32
  }
  func.func @transform_8(%arg0: i32) -> (i32, i32) {
    %c0_i32 = arith.constant 0 : i32
    %c0_i32_0 = arith.constant 0 : i32
    %c0_i32_1 = arith.constant 0 : i32
    return %c0_i32, %c0_i32_0 : i32, i32
  }
  func.func @transform_9(%arg0: i32) -> (i32, i32) {
    %c0_i32 = arith.constant 0 : i32
    %c0_i32_0 = arith.constant 0 : i32
    %c0_i32_1 = arith.constant 0 : i32
    return %c0_i32, %c0_i32_0 : i32, i32
  }
  func.func @transform_10(%arg0: i32) -> (i32, i32) {
    %c0_i32 = arith.constant 0 : i32
    %c0_i32_0 = arith.constant 0 : i32
    %c0_i32_1 = arith.constant 0 : i32
    return %c0_i32, %c0_i32_0 : i32, i32
  }
  func.func @transform_11(%arg0: i32) -> (i32, i32) {
    %c0_i32 = arith.constant 0 : i32
    %c0_i32_0 = arith.constant 0 : i32
    %c0_i32_1 = arith.constant 0 : i32
    return %c0_i32, %c0_i32_0 : i32, i32
  }
  func.func @transform_12(%arg0: i32) -> (i32, i32) {
    %c0_i32 = arith.constant 0 : i32
    %c0_i32_0 = arith.constant 0 : i32
    %c0_i32_1 = arith.constant 0 : i32
    return %c0_i32, %c0_i32_0 : i32, i32
  }
  func.func @transform_13(%arg0: i32) -> (i32, i32) {
    %c0_i32 = arith.constant 0 : i32
    %c0_i32_0 = arith.constant 0 : i32
    %c0_i32_1 = arith.constant 0 : i32
    return %c0_i32, %c0_i32_0 : i32, i32
  }
  func.func @transform_14(%arg0: i32) -> (i32, i32) {
    %c0_i32 = arith.constant 0 : i32
    %c0_i32_0 = arith.constant 0 : i32
    %c0_i32_1 = arith.constant 0 : i32
    return %c0_i32, %c0_i32_0 : i32, i32
  }
  func.func @transform_15(%arg0: i32) -> (i32, i32) {
    %c0_i32 = arith.constant 0 : i32
    %c0_i32_0 = arith.constant 0 : i32
    %c0_i32_1 = arith.constant 0 : i32
    return %c0_i32, %c0_i32_0 : i32, i32
  }
  func.func @transform_16(%arg0: i32) -> (i32, i32) {
    %c0_i32 = arith.constant 0 : i32
    %c0_i32_0 = arith.constant 0 : i32
    %c0_i32_1 = arith.constant 0 : i32
    return %c0_i32, %c0_i32_0 : i32, i32
  }
  func.func @transform_17(%arg0: i32) -> (i32, i32) {
    %c0_i32 = arith.constant 0 : i32
    %c0_i32_0 = arith.constant 0 : i32
    %c0_i32_1 = arith.constant 0 : i32
    return %c0_i32, %c0_i32_0 : i32, i32
  }
  func.func @transform_18(%arg0: i32) -> (i32, i32) {
    %c0_i32 = arith.constant 0 : i32
    %c0_i32_0 = arith.constant 0 : i32
    %c0_i32_1 = arith.constant 0 : i32
    return %c0_i32, %c0_i32_0 : i32, i32
  }
  func.func @transform_19(%arg0: i32) -> (i32, i32) {
    %c0_i32 = arith.constant 0 : i32
    %c0_i32_0 = arith.constant 0 : i32
    %c0_i32_1 = arith.constant 0 : i32
    return %c0_i32, %c0_i32_0 : i32, i32
  }
  func.func @transform_20(%arg0: i32) -> (i32, i32) {
    %c0_i32 = arith.constant 0 : i32
    %c0_i32_0 = arith.constant 0 : i32
    %c0_i32_1 = arith.constant 0 : i32
    return %c0_i32, %c0_i32_0 : i32, i32
  }
  func.func @transform_21(%arg0: i32) -> (i32, i32) {
    %c0_i32 = arith.constant 0 : i32
    %c0_i32_0 = arith.constant 0 : i32
    %c0_i32_1 = arith.constant 0 : i32
    return %c0_i32, %c0_i32_0 : i32, i32
  }
  func.func @transform_22(%arg0: i32) -> (i32, i32) {
    %c0_i32 = arith.constant 0 : i32
    %c0_i32_0 = arith.constant 0 : i32
    %c0_i32_1 = arith.constant 0 : i32
    return %c0_i32, %c0_i32_0 : i32, i32
  }
  func.func @transform_23(%arg0: i32) -> (i32, i32) {
    %c0_i32 = arith.constant 0 : i32
    %c0_i32_0 = arith.constant 0 : i32
    %c0_i32_1 = arith.constant 0 : i32
    return %c0_i32, %c0_i32_0 : i32, i32
  }
  func.func @transform_24(%arg0: i32) -> (i32, i32) {
    %c0_i32 = arith.constant 0 : i32
    %c0_i32_0 = arith.constant 0 : i32
    %c0_i32_1 = arith.constant 0 : i32
    return %c0_i32, %c0_i32_0 : i32, i32
  }
  func.func @transform_25(%arg0: i32) -> (i32, i32) {
    %c0_i32 = arith.constant 0 : i32
    %c0_i32_0 = arith.constant 0 : i32
    %c0_i32_1 = arith.constant 0 : i32
    return %c0_i32, %c0_i32_0 : i32, i32
  }
}

</mosaic_0001>

<llo_original>
// kernel: george_sae_bn_forward.1
$region0: #{george_sae_bn_forward.1}
  #allocation0 [shape = 'u32[]', space=smem, size = 0x4, offset = 0x4, fixed_abs, tag = 'smem constant byte address 0x4 - core index']
  #allocation1 [shape = 'u32[144,128]{1,0:T(1,128)}', space=vmem, size = 0x12000, scoped, tag = 'internal scratch']
  %s0 = inlined_call_operand.vmem [shape: f32[1,128], index: 0, kind: input, shape index: {}]
  %s1 = inlined_call_operand.vmem [shape: f32[16,200], index: 1, kind: input, shape index: {}]
  %s2 = inlined_call_operand.vmem [shape: f32[1,200], index: 2, kind: input, shape index: {}]
  %s3 = inlined_call_operand.vmem [shape: f32[1,200], index: 3, kind: input, shape index: {}]
  %s4 = inlined_call_operand.vmem [shape: f32[1,200], index: 4, kind: input, shape index: {}]
  %s5 = inlined_call_operand.vmem [shape: f32[200,100], index: 5, kind: input, shape index: {}]
  %s6 = inlined_call_operand.vmem [shape: f32[1,100], index: 6, kind: input, shape index: {}]
  %s7 = inlined_call_operand.vmem [shape: f32[1,100], index: 7, kind: input, shape index: {}]
  %s8 = inlined_call_operand.vmem [shape: f32[1,100], index: 8, kind: input, shape index: {}]
  %s9 = inlined_call_operand.vmem [shape: f32[100,50], index: 9, kind: input, shape index: {}]
  %s10 = inlined_call_operand.vmem [shape: f32[1,50], index: 10, kind: input, shape index: {}]
  %s11 = inlined_call_operand.vmem [shape: f32[1,50], index: 11, kind: input, shape index: {}]
  %s12 = inlined_call_operand.vmem [shape: f32[1,50], index: 12, kind: input, shape index: {}]
  %s13 = inlined_call_operand.vmem [shape: f32[50,8], index: 13, kind: input, shape index: {}]
  %s14 = inlined_call_operand.vmem [shape: f32[1,8], index: 14, kind: input, shape index: {}]
  %s15 = inlined_call_operand.vmem [shape: f32[1,8], index: 15, kind: input, shape index: {}]
  %s16 = inlined_call_operand.vmem [shape: f32[1,8], index: 16, kind: input, shape index: {}]
  %s17 = inlined_call_operand.vmem [shape: f32[8,50], index: 17, kind: input, shape index: {}]
  %s18 = inlined_call_operand.vmem [shape: f32[1,50], index: 18, kind: input, shape index: {}]
  %s19 = inlined_call_operand.vmem [shape: f32[50,100], index: 19, kind: input, shape index: {}]
  %s20 = inlined_call_operand.vmem [shape: f32[1,100], index: 20, kind: input, shape index: {}]
  %s21 = inlined_call_operand.vmem [shape: f32[100,200], index: 21, kind: input, shape index: {}]
  %s22 = inlined_call_operand.vmem [shape: f32[1,200], index: 22, kind: input, shape index: {}]
  %s23 = inlined_call_operand.vmem [shape: f32[200,16], index: 23, kind: input, shape index: {}]
  %s24 = inlined_call_operand.vmem [shape: f32[1,16], index: 24, kind: input, shape index: {}]
  %s25 = inlined_call_operand.vmem [shape: f32[1,128], index: 25, kind: output, shape index: {}]
  %s26 = sld [smem:[#allocation0]]
  $region110: #{george_sae_bn_forward.1} parent=0
    _
  %s28 = ssub.s32 1, %s26
  %s29 = scalar_select 0, %s28, %s26
  // Predicated region
  $region2: #{george_sae_bn_forward.1} parent=0 // pred_check
    _
  $region3: #{george_sae_bn_forward.1} parent=0 // pred_check_branch
    %31 = sbr.rel (0) target = $region5
  $region4: #{george_sae_bn_forward.1} parent=0 // pred_region
    _
  $region5: #{george_sae_bn_forward.1} parent=0 // pred_fallthru
    _
  // Predicated region
  $region6: #{george_sae_bn_forward.1} parent=0 // pred_check
    _
  $region7: #{george_sae_bn_forward.1} parent=0 // pred_check_branch
    %33 = sbr.rel (0) target = $region9
  $region8: #{george_sae_bn_forward.1} parent=0 // pred_region
    _
  $region9: #{george_sae_bn_forward.1} parent=0 // pred_fallthru
    _
  // Predicated region
  $region10: #{george_sae_bn_forward.1} parent=0 // pred_check
    _
  $region11: #{george_sae_bn_forward.1} parent=0 // pred_check_branch
    %35 = sbr.rel (0) target = $region13
  $region12: #{george_sae_bn_forward.1} parent=0 // pred_region
    _
  $region13: #{george_sae_bn_forward.1} parent=0 // pred_fallthru
    _
  // Predicated region
  $region14: #{george_sae_bn_forward.1} parent=0 // pred_check
    _
  $region15: #{george_sae_bn_forward.1} parent=0 // pred_check_branch
    %37 = sbr.rel (0) target = $region17
  $region16: #{george_sae_bn_forward.1} parent=0 // pred_region
    _
  $region17: #{george_sae_bn_forward.1} parent=0 // pred_fallthru
    _
  // Predicated region
  $region18: #{george_sae_bn_forward.1} parent=0 // pred_check
    _
  $region19: #{george_sae_bn_forward.1} parent=0 // pred_check_branch
    %39 = sbr.rel (0) target = $region21
  $region20: #{george_sae_bn_forward.1} parent=0 // pred_region
    _
  $region21: #{george_sae_bn_forward.1} parent=0 // pred_fallthru
    _
  // Predicated region
  $region22: #{george_sae_bn_forward.1} parent=0 // pred_check
    _
  $region23: #{george_sae_bn_forward.1} parent=0 // pred_check_branch
    %41 = sbr.rel (0) target = $region25
  $region24: #{george_sae_bn_forward.1} parent=0 // pred_region
    _
  $region25: #{george_sae_bn_forward.1} parent=0 // pred_fallthru
    _
  // Predicated region
  $region26: #{george_sae_bn_forward.1} parent=0 // pred_check
    _
  $region27: #{george_sae_bn_forward.1} parent=0 // pred_check_branch
    %43 = sbr.rel (0) target = $region29
  $region28: #{george_sae_bn_forward.1} parent=0 // pred_region
    _
  $region29: #{george_sae_bn_forward.1} parent=0 // pred_fallthru
    _
  // Predicated region
  $region30: #{george_sae_bn_forward.1} parent=0 // pred_check
    _
  $region31: #{george_sae_bn_forward.1} parent=0 // pred_check_branch
    %45 = sbr.rel (0) target = $region33
  $region32: #{george_sae_bn_forward.1} parent=0 // pred_region
    _
  $region33: #{george_sae_bn_forward.1} parent=0 // pred_fallthru
    _
  // Predicated region
  $region34: #{george_sae_bn_forward.1} parent=0 // pred_check
    _
  $region35: #{george_sae_bn_forward.1} parent=0 // pred_check_branch
    %47 = sbr.rel (0) target = $region37
  $region36: #{george_sae_bn_forward.1} parent=0 // pred_region
    _
  $region37: #{george_sae_bn_forward.1} parent=0 // pred_fallthru
    _
  // Predicated region
  $region38: #{george_sae_bn_forward.1} parent=0 // pred_check
    _
  $region39: #{george_sae_bn_forward.1} parent=0 // pred_check_branch
    %49 = sbr.rel (0) target = $region41
  $region40: #{george_sae_bn_forward.1} parent=0 // pred_region
    _
  $region41: #{george_sae_bn_forward.1} parent=0 // pred_fallthru
    _
  // Predicated region
  $region42: #{george_sae_bn_forward.1} parent=0 // pred_check
    _
  $region43: #{george_sae_bn_forward.1} parent=0 // pred_check_branch
    %51 = sbr.rel (0) target = $region45
  $region44: #{george_sae_bn_forward.1} parent=0 // pred_region
    _
  $region45: #{george_sae_bn_forward.1} parent=0 // pred_fallthru
    _
  // Predicated region
  $region46: #{george_sae_bn_forward.1} parent=0 // pred_check
    _
  $region47: #{george_sae_bn_forward.1} parent=0 // pred_check_branch
    %53 = sbr.rel (0) target = $region49
  $region48: #{george_sae_bn_forward.1} parent=0 // pred_region
    _
  $region49: #{george_sae_bn_forward.1} parent=0 // pred_fallthru
    _
  // Predicated region
  $region50: #{george_sae_bn_forward.1} parent=0 // pred_check
    _
  $region51: #{george_sae_bn_forward.1} parent=0 // pred_check_branch
    %55 = sbr.rel (0) target = $region53
  $region52: #{george_sae_bn_forward.1} parent=0 // pred_region
    _
  $region53: #{george_sae_bn_forward.1} parent=0 // pred_fallthru
    _
  // Predicated region
  $region54: #{george_sae_bn_forward.1} parent=0 // pred_check
    _
  $region55: #{george_sae_bn_forward.1} parent=0 // pred_check_branch
    %57 = sbr.rel (0) target = $region57
  $region56: #{george_sae_bn_forward.1} parent=0 // pred_region
    _
  $region57: #{george_sae_bn_forward.1} parent=0 // pred_fallthru
    _
  // Predicated region
  $region58: #{george_sae_bn_forward.1} parent=0 // pred_check
    _
  $region59: #{george_sae_bn_forward.1} parent=0 // pred_check_branch
    %59 = sbr.rel (0) target = $region61
  $region60: #{george_sae_bn_forward.1} parent=0 // pred_region
    _
  $region61: #{george_sae_bn_forward.1} parent=0 // pred_fallthru
    _
  // Predicated region
  $region62: #{george_sae_bn_forward.1} parent=0 // pred_check
    _
  $region63: #{george_sae_bn_forward.1} parent=0 // pred_check_branch
    %61 = sbr.rel (0) target = $region65
  $region64: #{george_sae_bn_forward.1} parent=0 // pred_region
    _
  $region65: #{george_sae_bn_forward.1} parent=0 // pred_fallthru
    _
  // Predicated region
  $region66: #{george_sae_bn_forward.1} parent=0 // pred_check
    _
  $region67: #{george_sae_bn_forward.1} parent=0 // pred_check_branch
    %63 = sbr.rel (0) target = $region69
  $region68: #{george_sae_bn_forward.1} parent=0 // pred_region
    _
  $region69: #{george_sae_bn_forward.1} parent=0 // pred_fallthru
    _
  // Predicated region
  $region70: #{george_sae_bn_forward.1} parent=0 // pred_check
    _
  $region71: #{george_sae_bn_forward.1} parent=0 // pred_check_branch
    %65 = sbr.rel (0) target = $region73
  $region72: #{george_sae_bn_forward.1} parent=0 // pred_region
    _
  $region73: #{george_sae_bn_forward.1} parent=0 // pred_fallthru
    _
  // Predicated region
  $region74: #{george_sae_bn_forward.1} parent=0 // pred_check
    _
  $region75: #{george_sae_bn_forward.1} parent=0 // pred_check_branch
    %67 = sbr.rel (0) target = $region77
  $region76: #{george_sae_bn_forward.1} parent=0 // pred_region
    _
  $region77: #{george_sae_bn_forward.1} parent=0 // pred_fallthru
    _
  // Predicated region
  $region78: #{george_sae_bn_forward.1} parent=0 // pred_check
    _
  $region79: #{george_sae_bn_forward.1} parent=0 // pred_check_branch
    %69 = sbr.rel (0) target = $region81
  $region80: #{george_sae_bn_forward.1} parent=0 // pred_region
    _
  $region81: #{george_sae_bn_forward.1} parent=0 // pred_fallthru
    _
  // Predicated region
  $region82: #{george_sae_bn_forward.1} parent=0 // pred_check
    _
  $region83: #{george_sae_bn_forward.1} parent=0 // pred_check_branch
    %71 = sbr.rel (0) target = $region85
  $region84: #{george_sae_bn_forward.1} parent=0 // pred_region
    _
  $region85: #{george_sae_bn_forward.1} parent=0 // pred_fallthru
    _
  // Predicated region
  $region86: #{george_sae_bn_forward.1} parent=0 // pred_check
    _
  $region87: #{george_sae_bn_forward.1} parent=0 // pred_check_branch
    %73 = sbr.rel (0) target = $region89
  $region88: #{george_sae_bn_forward.1} parent=0 // pred_region
    _
  $region89: #{george_sae_bn_forward.1} parent=0 // pred_fallthru
    _
  // Predicated region
  $region90: #{george_sae_bn_forward.1} parent=0 // pred_check
    _
  $region91: #{george_sae_bn_forward.1} parent=0 // pred_check_branch
    %75 = sbr.rel (0) target = $region93
  $region92: #{george_sae_bn_forward.1} parent=0 // pred_region
    _
  $region93: #{george_sae_bn_forward.1} parent=0 // pred_fallthru
    _
  // Predicated region
  $region94: #{george_sae_bn_forward.1} parent=0 // pred_check
    _
  $region95: #{george_sae_bn_forward.1} parent=0 // pred_check_branch
    %77 = sbr.rel (0) target = $region97
  $region96: #{george_sae_bn_forward.1} parent=0 // pred_region
    _
  $region97: #{george_sae_bn_forward.1} parent=0 // pred_fallthru
    _
  // Predicated region
  $region98: #{george_sae_bn_forward.1} parent=0 // pred_check
    _
  $region99: #{george_sae_bn_forward.1} parent=0 // pred_check_branch
    %79 = sbr.rel (0) target = $region101
  $region100: #{george_sae_bn_forward.1} parent=0 // pred_region
    _
  $region101: #{george_sae_bn_forward.1} parent=0 // pred_fallthru
    _
  %v81 = vld [vmem:[%s0] sm:$0x1]
  %v83 = vlaneseq
  %v84 = vshrl.u32 %v83, 7
  %v85 = vsub.s32 0, %v84
  %v86 = vrot.slane %v81, %v85
  %87 = vrot.lane.b32.xlu0 %v86, 112
  %v88 = vpop.permute.xlu0 %87
  %90 = vrot.lane.b32.xlu0 %v86, 96
  %v91 = vpop.permute.xlu0 %90
  %93 = vrot.lane.b32.xlu0 %v86, 80
  %v94 = vpop.permute.xlu0 %93
  %96 = vrot.lane.b32.xlu0 %v86, 64
  %v97 = vpop.permute.xlu0 %96
  %99 = vrot.lane.b32.xlu0 %v86, 48
  %v100 = vpop.permute.xlu0 %99
  %102 = vrot.lane.b32.xlu0 %v86, 32
  %v103 = vpop.permute.xlu0 %102
  %105 = vrot.lane.b32.xlu0 %v86, 16
  %v106 = vpop.permute.xlu0 %105
  %vm108 = vcmask 1040384
  %v109 = vsel %vm108, %v81, %v88
  %vm110 = vcmask 1041408
  %v111 = vsel %vm110, %v109, %v91
  %vm112 = vcmask 1042432
  %v113 = vsel %vm112, %v111, %v94
  %vm114 = vcmask 1043456
  %v115 = vsel %vm114, %v113, %v97
  %vm116 = vcmask 1044480
  %v117 = vsel %vm116, %v115, %v100
  %vm118 = vcmask 1045504
  %v119 = vsel %vm118, %v117, %v103
  %vm120 = vcmask 1046528
  %v121 = vsel %vm120, %v119, %v106
  %v122 = vld [vmem:[%s1] sm:$0xff]
  %v123 = vld [vmem:[%s1 + $0x8] sm:$0xff]
  %v124 = vld [vmem:[%s1 + $0x10] sm:$0xff]
  %v125 = vld [vmem:[%s1 + $0x18] sm:$0xff]
  %v126 = vpack.c.bf16 %v121, %v121
  %v127 = vpack.c.bf16 %v124, %v122
  %v128 = vpack.c.bf16 %v125, %v123
  %v129 = vld [vmem:[%s2] sm:$0x3]
  %v131 = vlaneseq
  %v132 = vshrl.u32 %v131, 7
  %v133 = vsub.s32 0, %v132
  %v134 = vrot.slane %v129, %v133
  %v135 = vlaneseq
  %v136 = vshrl.u32 %v135, 7
  %v137 = vsub.s32 1, %v136
  %v138 = vrot.slane %v129, %v137
  %vm141 = vcmask 130048
  %v143 = vsel %vm141, %v126, 0
  %145 = vmatprep.subr.bf16.mxu0 0
  %146 = vmatpush1.bf16.msra.mxu0 0
  %147 = vmatprep.subr.bf16.mxu0 0
  %148 = vmatpush1.bf16.msra.mxu0 0
  %149 = vmatprep.subr.bf16.mxu0 0
  %150 = vmatpush1.bf16.msra.mxu0 0
  %151 = vmatprep.subr.bf16.mxu0 0
  %152 = vmatpush1.bf16.msra.mxu0 0
  %153 = vmatprep.subr.bf16.mxu0 0
  %154 = vmatpush1.bf16.msra.mxu0 0
  %155 = vmatprep.subr.bf16.mxu0 0
  %156 = vmatpush1.bf16.msra.mxu0 0
  %157 = vmatprep.subr.bf16.mxu0 0
  %158 = vmatpush1.bf16.msra.mxu0 0
  %159 = vmatprep.subr.bf16.mxu0 %v128
  %160 = vmatpush1.bf16.msra.mxu0 %v127
  %161 = vmatprep.subr.bf16.mxu0 0
  %162 = vmatpush2.bf16.msra.mxu0 0
  %163 = vmatprep.subr.bf16.mxu0 0
  %164 = vmatpush2.bf16.msra.mxu0 0
  %165 = vmatprep.subr.bf16.mxu0 0
  %166 = vmatpush2.bf16.msra.mxu0 0
  %167 = vmatprep.subr.bf16.mxu0 0
  %168 = vmatpush2.bf16.msra.mxu0 0
  %169 = vmatprep.subr.bf16.mxu0 0
  %170 = vmatpush2.bf16.msra.mxu0 0
  %171 = vmatprep.subr.bf16.mxu0 0
  %172 = vmatpush2.bf16.msra.mxu0 0
  %173 = vmatprep.subr.bf16.mxu0 0
  %174 = vmatpush2.bf16.msra.mxu0 0
  %175 = vmatprep.subr.bf16.mxu0 0
  %176 = vmatpush2.bf16.msra.mxu0 0
  %177 = vmatprep.mubr.bf16.mxu0 0
  %178 = vmatmul.mubr.bf16.gmra.mxu0 %v143
  %v179 = vpop.f32.mrf.mxu0
  %v180 = vadd.f32 %v134, %v179
  %v181 = vpop.f32.mrf.mxu0
  %v182 = vadd.f32 %v138, %v181
  %v183 = vpop.f32.mrf.mxu0
  %v184 = vpop.f32.mrf.mxu0
  %185 = vdwg.mxu0
  %v186 = vmul.f32 %v180, 0.01
  %v187 = vmul.f32 %v182, 0.01
  %v188 = vmax.f32 %v180, %v186
  %v189 = vmax.f32 %v182, %v187
  %v190 = vrot.slane %v188, 4
  %v191 = vadd.f32 %v188, %v190
  %v192 = vrot.slane %v191, 2
  %v193 = vadd.f32 %v191, %v192
  %v194 = vrot.slane %v193, 1
  %v195 = vadd.f32 %v193, %v194
  %vm196 = vcmask 588800
  %v197 = vsel %vm196, %v189, 0.0
  %v198 = vrot.slane %v197, 4
  %v199 = vadd.f32 %v197, %v198
  %v200 = vrot.slane %v199, 2
  %v201 = vadd.f32 %v199, %v200
  %v202 = vrot.slane %v201, 1
  %v203 = vadd.f32 %v201, %v202
  %v204 = vmul.f32 %v195, 0.125
  %v205 = vmul.f32 %v203, 0.125
  %v206 = vsub.f32 %v188, %v204
  %v207 = vsub.f32 %v189, %v205
  %v208 = vmul.f32 %v206, %v206
  %v209 = vmul.f32 %v207, %v207
  %v210 = vrot.slane %v208, 4
  %v211 = vadd.f32 %v208, %v210
  %v212 = vrot.slane %v211, 2
  %v213 = vadd.f32 %v211, %v212
  %v214 = vrot.slane %v213, 1
  %v215 = vadd.f32 %v213, %v214
  %v216 = vsel %vm196, %v209, 0.0
  %v217 = vrot.slane %v216, 4
  %v218 = vadd.f32 %v216, %v217
  %v219 = vrot.slane %v218, 2
  %v220 = vadd.f32 %v218, %v219
  %v221 = vrot.slane %v220, 1
  %v222 = vadd.f32 %v220, %v221
  %v223 = vmul.f32 %v215, 0.125
  %v224 = vmul.f32 %v222, 0.125
  %v225 = vld [vmem:[%s3] sm:$0x3]
  %v226 = vadd.f32 %v223, 1e-05
  %v227 = vadd.f32 %v224, 1e-05
  %v228 = vrsqrt.pop %v226
  %v229 = vrsqrt.pop %v227
  %v232 = vcombine.low %v228, %v229
  %v234 = vunpack.c.l.s4 1966171168
  %v235 = vunpack.c.0.s8 %v234
  %v236 = vlaneseq
  %v237 = vshrl.u32 %v236, 7
  %v238 = vsub.s32 %v235, %v237
  %v239 = vrot.slane %v232, %v238
  %v241 = vunpack.c.l.s4 1966171168
  %v242 = vunpack.c.0.s8 %v241
  %v243 = vlaneseq
  %v244 = vshrl.u32 %v243, 7
  %v245 = vsub.s32 %v242, %v244
  %v246 = vrot.slane %v239, %v245
  %v248 = vmul.f32 %v225, %v246
  %v250 = vlaneseq
  %v251 = vshrl.u32 %v250, 7
  %v252 = vsub.s32 0, %v251
  %v253 = vrot.slane %v248, %v252
  %v254 = vlaneseq
  %v255 = vshrl.u32 %v254, 7
  %v256 = vsub.s32 1, %v255
  %v257 = vrot.slane %v248, %v256
  %v260 = vmul.f32 %v206, %v253
  %v261 = vmul.f32 %v207, %v257
  %v262 = vld [vmem:[%s4] sm:$0x3]
  %v264 = vlaneseq
  %v265 = vshrl.u32 %v264, 7
  %v266 = vsub.s32 0, %v265
  %v267 = vrot.slane %v262, %v266
  %v268 = vlaneseq
  %v269 = vshrl.u32 %v268, 7
  %v270 = vsub.s32 1, %v269
  %v271 = vrot.slane %v262, %v270
  %v274 = vadd.f32 %v260, %v267
  %v275 = vadd.f32 %v261, %v271
  %v276 = vld [vmem:[%s5] sm:$0xff]
  %v277 = vld [vmem:[%s5 + $0x8] sm:$0xff]
  %v278 = vld [vmem:[%s5 + $0x10] sm:$0xff]
  %v279 = vld [vmem:[%s5 + $0x18] sm:$0xff]
  %v280 = vld [vmem:[%s5 + $0x20] sm:$0xff]
  %v281 = vld [vmem:[%s5 + $0x28] sm:$0xff]
  %v282 = vld [vmem:[%s5 + $0x30] sm:$0xff]
  %v283 = vld [vmem:[%s5 + $0x38] sm:$0xff]
  %v284 = vld [vmem:[%s5 + $0x40] sm:$0xff]
  %v285 = vld [vmem:[%s5 + $0x48] sm:$0xff]
  %v286 = vld [vmem:[%s5 + $0x50] sm:$0xff]
  %v287 = vld [vmem:[%s5 + $0x58] sm:$0xff]
  %v288 = vld [vmem:[%s5 + $0x60] sm:$0xff]
  %v289 = vld [vmem:[%s5 + $0x68] sm:$0xff]
  %v290 = vld [vmem:[%s5 + $0x70] sm:$0xff]
  %v291 = vld [vmem:[%s5 + $0x78] sm:$0xff]
  %v292 = vld [vmem:[%s5 + $0x80] sm:$0xff]
  %v293 = vld [vmem:[%s5 + $0x88] sm:$0xff]
  %v294 = vld [vmem:[%s5 + $0x90] sm:$0xff]
  %v295 = vld [vmem:[%s5 + $0x98] sm:$0xff]
  %v296 = vld [vmem:[%s5 + $0xa0] sm:$0xff]
  %v297 = vld [vmem:[%s5 + $0xa8] sm:$0xff]
  %v298 = vld [vmem:[%s5 + $0xb0] sm:$0xff]
  %v299 = vld [vmem:[%s5 + $0xb8] sm:$0xff]
  %v300 = vld [vmem:[%s5 + $0xc0] sm:$0xff]
  %v301 = vpack.c.bf16 %v274, %v274
  %v302 = vpack.c.bf16 %v275, %v275
  %v303 = vpack.c.bf16 %v277, %v276
  %v304 = vpack.c.bf16 %v279, %v278
  %v305 = vpack.c.bf16 %v281, %v280
  %v306 = vpack.c.bf16 %v283, %v282
  %v307 = vpack.c.bf16 %v285, %v284
  %v308 = vpack.c.bf16 %v287, %v286
  %v309 = vpack.c.bf16 %v289, %v288
  %v310 = vpack.c.bf16 %v291, %v290
  %v311 = vpack.c.bf16 %v293, %v292
  %v312 = vpack.c.bf16 %v295, %v294
  %v313 = vpack.c.bf16 %v297, %v296
  %v314 = vpack.c.bf16 %v299, %v298
  %v315 = vpack.c.bf16 %v300, %v300
  %v316 = vld [vmem:[%s6] sm:$0x1]
  %v318 = vlaneseq
  %v319 = vshrl.u32 %v318, 7
  %v320 = vsub.s32 0, %v319
  %v321 = vrot.slane %v316, %v320
  %v324 = vsel %vm196, %v302, 0
  %v327 = vsel %vm114, %v315, 0
  %329 = vmatprep.subr.bf16.mxu0 0
  %330 = vmatpush1.bf16.msra.mxu0 %v310
  %331 = vmatprep.subr.bf16.mxu0 0
  %332 = vmatpush1.bf16.msra.mxu0 %v309
  %333 = vmatprep.subr.bf16.mxu0 0
  %334 = vmatpush1.bf16.msra.mxu0 %v308
  %335 = vmatprep.subr.bf16.mxu0 0
  %336 = vmatpush1.bf16.msra.mxu0 %v307
  %337 = vmatprep.subr.bf16.mxu0 0
  %338 = vmatpush1.bf16.msra.mxu0 %v306
  %339 = vmatprep.subr.bf16.mxu0 0
  %340 = vmatpush1.bf16.msra.mxu0 %v305
  %341 = vmatprep.subr.bf16.mxu0 0
  %342 = vmatpush1.bf16.msra.mxu0 %v304
  %343 = vmatprep.subr.bf16.mxu0 0
  %344 = vmatpush1.bf16.msra.mxu0 %v303
  %345 = vmatprep.subr.bf16.mxu0 0
  %346 = vmatpush2.bf16.msra.mxu0 0
  %347 = vmatprep.subr.bf16.mxu0 0
  %348 = vmatpush2.bf16.msra.mxu0 0
  %349 = vmatprep.subr.bf16.mxu0 0
  %350 = vmatpush2.bf16.msra.mxu0 0
  %351 = vmatprep.subr.bf16.mxu0 0
  %352 = vmatpush2.bf16.msra.mxu0 %v327
  %353 = vmatprep.subr.bf16.mxu0 0
  %354 = vmatpush2.bf16.msra.mxu0 %v314
  %355 = vmatprep.subr.bf16.mxu0 0
  %356 = vmatpush2.bf16.msra.mxu0 %v313
  %357 = vmatprep.subr.bf16.mxu0 0
  %358 = vmatpush2.bf16.msra.mxu0 %v312
  %359 = vmatprep.subr.bf16.mxu0 0
  %360 = vmatpush2.bf16.msra.mxu0 %v311
  %361 = vmatprep.mubr.bf16.mxu0 %v324
  %362 = vmatmul.mubr.bf16.gmra.mxu0 %v301
  %v363 = vpop.f32.mrf.mxu0
  %v364 = vadd.f32 %v321, %v363
  %v365 = vpop.f32.mrf.mxu0
  %v366 = vpop.f32.mrf.mxu0
  %v367 = vpop.f32.mrf.mxu0
  %368 = vdwg.mxu0
  %v369 = vmul.f32 %v364, 0.01
  %v370 = vmax.f32 %v364, %v369
  %vm371 = vcmask 818176
  %v372 = vsel %vm371, %v370, 0.0
  %v373 = vrot.slane %v372, 4
  %v374 = vadd.f32 %v372, %v373
  %v375 = vrot.slane %v374, 2
  %v376 = vadd.f32 %v374, %v375
  %v377 = vrot.slane %v376, 1
  %v378 = vadd.f32 %v376, %v377
  %v379 = vmul.f32 %v378, 0.125
  %v380 = vsub.f32 %v370, %v379
  %v381 = vmul.f32 %v380, %v380
  %v382 = vsel %vm371, %v381, 0.0
  %v383 = vrot.slane %v382, 4
  %v384 = vadd.f32 %v382, %v383
  %v385 = vrot.slane %v384, 2
  %v386 = vadd.f32 %v384, %v385
  %v387 = vrot.slane %v386, 1
  %v388 = vadd.f32 %v386, %v387
  %v389 = vmul.f32 %v388, 0.125
  %v390 = vld [vmem:[%s7] sm:$0x1]
  %v391 = vadd.f32 %v389, 1e-05
  %v392 = vrsqrt.pop %v391
  %v393 = vmul.f32 %v390, %v392
  %v395 = vlaneseq
  %v396 = vshrl.u32 %v395, 7
  %v397 = vsub.s32 0, %v396
  %v398 = vrot.slane %v393, %v397
  %v400 = vmul.f32 %v380, %v398
  %v401 = vld [vmem:[%s8] sm:$0x1]
  %v403 = vlaneseq
  %v404 = vshrl.u32 %v403, 7
  %v405 = vsub.s32 0, %v404
  %v406 = vrot.slane %v401, %v405
  %v408 = vadd.f32 %v400, %v406
  %v409 = vld [vmem:[%s9] sm:$0xff]
  %v410 = vld [vmem:[%s9 + $0x8] sm:$0xff]
  %v411 = vld [vmem:[%s9 + $0x10] sm:$0xff]
  %v412 = vld [vmem:[%s9 + $0x18] sm:$0xff]
  %v413 = vld [vmem:[%s9 + $0x20] sm:$0xff]
  %v414 = vld [vmem:[%s9 + $0x28] sm:$0xff]
  %v415 = vld [vmem:[%s9 + $0x30] sm:$0xff]
  %v416 = vld [vmem:[%s9 + $0x38] sm:$0xff]
  %v417 = vld [vmem:[%s9 + $0x40] sm:$0xff]
  %v418 = vld [vmem:[%s9 + $0x48] sm:$0xff]
  %v419 = vld [vmem:[%s9 + $0x50] sm:$0xff]
  %v420 = vld [vmem:[%s9 + $0x58] sm:$0xff]
  %v421 = vld [vmem:[%s9 + $0x60] sm:$0xf]
  %v422 = vpack.c.bf16 %v408, %v408
  %v423 = vpack.c.bf16 %v410, %v409
  %v424 = vpack.c.bf16 %v412, %v411
  %v425 = vpack.c.bf16 %v414, %v413
  %v426 = vpack.c.bf16 %v416, %v415
  %v427 = vpack.c.bf16 %v418, %v417
  %v428 = vpack.c.bf16 %v420, %v419
  %v429 = vpack.c.bf16 %v421, %v421
  %v430 = vld [vmem:[%s10] sm:$0x1]
  %v432 = vlaneseq
  %v433 = vshrl.u32 %v432, 7
  %v434 = vsub.s32 0, %v433
  %v435 = vrot.slane %v430, %v434
  %v438 = vsel %vm371, %v422, 0
  %v441 = vsel %vm110, %v429, 0
  %443 = vmatprep.subr.bf16.mxu0 0
  %444 = vmatpush1.bf16.msra.mxu0 0
  %445 = vmatprep.subr.bf16.mxu0 0
  %446 = vmatpush1.bf16.msra.mxu0 %v441
  %447 = vmatprep.subr.bf16.mxu0 0
  %448 = vmatpush1.bf16.msra.mxu0 %v428
  %449 = vmatprep.subr.bf16.mxu0 0
  %450 = vmatpush1.bf16.msra.mxu0 %v427
  %451 = vmatprep.subr.bf16.mxu0 0
  %452 = vmatpush1.bf16.msra.mxu0 %v426
  %453 = vmatprep.subr.bf16.mxu0 0
  %454 = vmatpush1.bf16.msra.mxu0 %v425
  %455 = vmatprep.subr.bf16.mxu0 0
  %456 = vmatpush1.bf16.msra.mxu0 %v424
  %457 = vmatprep.subr.bf16.mxu0 0
  %458 = vmatpush1.bf16.msra.mxu0 %v423
  %459 = vmatprep.subr.bf16.mxu0 0
  %460 = vmatpush2.bf16.msra.mxu0 0
  %461 = vmatprep.subr.bf16.mxu0 0
  %462 = vmatpush2.bf16.msra.mxu0 0
  %463 = vmatprep.subr.bf16.mxu0 0
  %464 = vmatpush2.bf16.msra.mxu0 0
  %465 = vmatprep.subr.bf16.mxu0 0
  %466 = vmatpush2.bf16.msra.mxu0 0
  %467 = vmatprep.subr.bf16.mxu0 0
  %468 = vmatpush2.bf16.msra.mxu0 0
  %469 = vmatprep.subr.bf16.mxu0 0
  %470 = vmatpush2.bf16.msra.mxu0 0
  %471 = vmatprep.subr.bf16.mxu0 0
  %472 = vmatpush2.bf16.msra.mxu0 0
  %473 = vmatprep.subr.bf16.mxu0 0
  %474 = vmatpush2.bf16.msra.mxu0 0
  %475 = vmatprep.mubr.bf16.mxu0 0
  %476 = vmatmul.mubr.bf16.gmra.mxu0 %v438
  %v477 = vpop.f32.mrf.mxu0
  %v478 = vadd.f32 %v435, %v477
  %v479 = vpop.f32.mrf.mxu0
  %v480 = vpop.f32.mrf.mxu0
  %v481 = vpop.f32.mrf.mxu0
  %482 = vdwg.mxu0
  %v483 = vmul.f32 %v478, 0.01
  %v484 = vmax.f32 %v478, %v483
  %vm485 = vcmask 408576
  %v486 = vsel %vm485, %v484, 0.0
  %v487 = vrot.slane %v486, 4
  %v488 = vadd.f32 %v486, %v487
  %v489 = vrot.slane %v488, 2
  %v490 = vadd.f32 %v488, %v489
  %v491 = vrot.slane %v490, 1
  %v492 = vadd.f32 %v490, %v491
  %v493 = vmul.f32 %v492, 0.125
  %v494 = vsub.f32 %v484, %v493
  %v495 = vmul.f32 %v494, %v494
  %v496 = vsel %vm485, %v495, 0.0
  %v497 = vrot.slane %v496, 4
  %v498 = vadd.f32 %v496, %v497
  %v499 = vrot.slane %v498, 2
  %v500 = vadd.f32 %v498, %v499
  %v501 = vrot.slane %v500, 1
  %v502 = vadd.f32 %v500, %v501
  %v503 = vmul.f32 %v502, 0.125
  %v504 = vld [vmem:[%s11] sm:$0x1]
  %v505 = vadd.f32 %v503, 1e-05
  %v506 = vrsqrt.pop %v505
  %v507 = vmul.f32 %v504, %v506
  %v509 = vlaneseq
  %v510 = vshrl.u32 %v509, 7
  %v511 = vsub.s32 0, %v510
  %v512 = vrot.slane %v507, %v511
  %v514 = vmul.f32 %v494, %v512
  %v515 = vld [vmem:[%s12] sm:$0x1]
  %v517 = vlaneseq
  %v518 = vshrl.u32 %v517, 7
  %v519 = vsub.s32 0, %v518
  %v520 = vrot.slane %v515, %v519
  %v522 = vadd.f32 %v514, %v520
  %v523 = vld [vmem:[%s13] sm:$0xff]
  %v524 = vld [vmem:[%s13 + $0x8] sm:$0xff]
  %v525 = vld [vmem:[%s13 + $0x10] sm:$0xff]
  %v526 = vld [vmem:[%s13 + $0x18] sm:$0xff]
  %v527 = vld [vmem:[%s13 + $0x20] sm:$0xff]
  %v528 = vld [vmem:[%s13 + $0x28] sm:$0xff]
  %v529 = vld [vmem:[%s13 + $0x30] sm:$0x3]
  %v530 = vpack.c.bf16 %v522, %v522
  %v531 = vpack.c.bf16 %v524, %v523
  %v532 = vpack.c.bf16 %v526, %v525
  %v533 = vpack.c.bf16 %v528, %v527
  %v534 = vpack.c.bf16 %v529, %v529
  %v535 = vld [vmem:[%s14] sm:$0x1]
  %v537 = vlaneseq
  %v538 = vshrl.u32 %v537, 7
  %v539 = vsub.s32 0, %v538
  %v540 = vrot.slane %v535, %v539
  %v543 = vsel %vm485, %v530, 0
  %v546 = vsel %vm108, %v534, 0
  %548 = vmatprep.subr.bf16.mxu0 0
  %549 = vmatpush1.bf16.msra.mxu0 0
  %550 = vmatprep.subr.bf16.mxu0 0
  %551 = vmatpush1.bf16.msra.mxu0 0
  %552 = vmatprep.subr.bf16.mxu0 0
  %553 = vmatpush1.bf16.msra.mxu0 0
  %554 = vmatprep.subr.bf16.mxu0 0
  %555 = vmatpush1.bf16.msra.mxu0 0
  %556 = vmatprep.subr.bf16.mxu0 0
  %557 = vmatpush1.bf16.msra.mxu0 %v546
  %558 = vmatprep.subr.bf16.mxu0 0
  %559 = vmatpush1.bf16.msra.mxu0 %v533
  %560 = vmatprep.subr.bf16.mxu0 0
  %561 = vmatpush1.bf16.msra.mxu0 %v532
  %562 = vmatprep.subr.bf16.mxu0 0
  %563 = vmatpush1.bf16.msra.mxu0 %v531
  %564 = vmatprep.subr.bf16.mxu0 0
  %565 = vmatpush2.bf16.msra.mxu0 0
  %566 = vmatprep.subr.bf16.mxu0 0
  %567 = vmatpush2.bf16.msra.mxu0 0
  %568 = vmatprep.subr.bf16.mxu0 0
  %569 = vmatpush2.bf16.msra.mxu0 0
  %570 = vmatprep.subr.bf16.mxu0 0
  %571 = vmatpush2.bf16.msra.mxu0 0
  %572 = vmatprep.subr.bf16.mxu0 0
  %573 = vmatpush2.bf16.msra.mxu0 0
  %574 = vmatprep.subr.bf16.mxu0 0
  %575 = vmatpush2.bf16.msra.mxu0 0
  %576 = vmatprep.subr.bf16.mxu0 0
  %577 = vmatpush2.bf16.msra.mxu0 0
  %578 = vmatprep.subr.bf16.mxu0 0
  %579 = vmatpush2.bf16.msra.mxu0 0
  %580 = vmatprep.mubr.bf16.mxu0 0
  %581 = vmatmul.mubr.bf16.gmra.mxu0 %v543
  %v582 = vpop.f32.mrf.mxu0
  %v583 = vadd.f32 %v540, %v582
  %v584 = vpop.f32.mrf.mxu0
  %v585 = vpop.f32.mrf.mxu0
  %v586 = vpop.f32.mrf.mxu0
  %587 = vdwg.mxu0
  %v588 = vmul.f32 %v583, 0.01
  %v589 = vmax.f32 %v583, %v588
  %vm590 = vcmask 64512
  %v591 = vsel %vm590, %v589, 0.0
  %v592 = vrot.slane %v591, 4
  %v593 = vadd.f32 %v591, %v592
  %v594 = vrot.slane %v593, 2
  %v595 = vadd.f32 %v593, %v594
  %v596 = vrot.slane %v595, 1
  %v597 = vadd.f32 %v595, %v596
  %v598 = vmul.f32 %v597, 0.125
  %v599 = vsub.f32 %v589, %v598
  %v600 = vmul.f32 %v599, %v599
  %v601 = vsel %vm590, %v600, 0.0
  %v602 = vrot.slane %v601, 4
  %v603 = vadd.f32 %v601, %v602
  %v604 = vrot.slane %v603, 2
  %v605 = vadd.f32 %v603, %v604
  %v606 = vrot.slane %v605, 1
  %v607 = vadd.f32 %v605, %v606
  %v608 = vmul.f32 %v607, 0.125
  %v609 = vld [vmem:[%s15] sm:$0x1]
  %v610 = vadd.f32 %v608, 1e-05
  %v611 = vrsqrt.pop %v610
  %v612 = vmul.f32 %v609, %v611
  %v614 = vlaneseq
  %v615 = vshrl.u32 %v614, 7
  %v616 = vsub.s32 0, %v615
  %v617 = vrot.slane %v612, %v616
  %v619 = vmul.f32 %v599, %v617
  %v620 = vld [vmem:[%s16] sm:$0x1]
  %v622 = vlaneseq
  %v623 = vshrl.u32 %v622, 7
  %v624 = vsub.s32 0, %v623
  %v625 = vrot.slane %v620, %v624
  %v627 = vadd.f32 %v619, %v625
  %v628 = vld [vmem:[%s17] sm:$0xff]
  %v629 = vpack.c.bf16 %v627, %v627
  %v630 = vpack.c.bf16 %v628, %v628
  %v631 = vld [vmem:[%s18] sm:$0x1]
  %v633 = vlaneseq
  %v634 = vshrl.u32 %v633, 7
  %v635 = vsub.s32 0, %v634
  %v636 = vrot.slane %v631, %v635
  %v639 = vsel %vm590, %v629, 0
  %v642 = vsel %vm114, %v630, 0
  %644 = vmatprep.subr.bf16.mxu0 0
  %645 = vmatpush1.bf16.msra.mxu0 0
  %646 = vmatprep.subr.bf16.mxu0 0
  %647 = vmatpush1.bf16.msra.mxu0 0
  %648 = vmatprep.subr.bf16.mxu0 0
  %649 = vmatpush1.bf16.msra.mxu0 0
  %650 = vmatprep.subr.bf16.mxu0 0
  %651 = vmatpush1.bf16.msra.mxu0 0
  %652 = vmatprep.subr.bf16.mxu0 0
  %653 = vmatpush1.bf16.msra.mxu0 0
  %654 = vmatprep.subr.bf16.mxu0 0
  %655 = vmatpush1.bf16.msra.mxu0 0
  %656 = vmatprep.subr.bf16.mxu0 0
  %657 = vmatpush1.bf16.msra.mxu0 0
  %658 = vmatprep.subr.bf16.mxu0 0
  %659 = vmatpush1.bf16.msra.mxu0 %v642
  %660 = vmatprep.subr.bf16.mxu0 0
  %661 = vmatpush2.bf16.msra.mxu0 0
  %662 = vmatprep.subr.bf16.mxu0 0
  %663 = vmatpush2.bf16.msra.mxu0 0
  %664 = vmatprep.subr.bf16.mxu0 0
  %665 = vmatpush2.bf16.msra.mxu0 0
  %666 = vmatprep.subr.bf16.mxu0 0
  %667 = vmatpush2.bf16.msra.mxu0 0
  %668 = vmatprep.subr.bf16.mxu0 0
  %669 = vmatpush2.bf16.msra.mxu0 0
  %670 = vmatprep.subr.bf16.mxu0 0
  %671 = vmatpush2.bf16.msra.mxu0 0
  %672 = vmatprep.subr.bf16.mxu0 0
  %673 = vmatpush2.bf16.msra.mxu0 0
  %674 = vmatprep.subr.bf16.mxu0 0
  %675 = vmatpush2.bf16.msra.mxu0 0
  %676 = vmatprep.mubr.bf16.mxu0 0
  %677 = vmatmul.mubr.bf16.gmra.mxu0 %v639
  %v678 = vpop.f32.mrf.mxu0
  %v679 = vadd.f32 %v636, %v678
  %v680 = vpop.f32.mrf.mxu0
  %v681 = vpop.f32.mrf.mxu0
  %v682 = vpop.f32.mrf.mxu0
  %683 = vdwg.mxu0
  %v684 = vmul.f32 %v679, 0.01
  %v685 = vmax.f32 %v679, %v684
  %v686 = vld [vmem:[%s19] sm:$0xff]
  %v687 = vld [vmem:[%s19 + $0x8] sm:$0xff]
  %v688 = vld [vmem:[%s19 + $0x10] sm:$0xff]
  %v689 = vld [vmem:[%s19 + $0x18] sm:$0xff]
  %v690 = vld [vmem:[%s19 + $0x20] sm:$0xff]
  %v691 = vld [vmem:[%s19 + $0x28] sm:$0xff]
  %v692 = vld [vmem:[%s19 + $0x30] sm:$0x3]
  %v693 = vpack.c.bf16 %v685, %v685
  %v694 = vpack.c.bf16 %v687, %v686
  %v695 = vpack.c.bf16 %v689, %v688
  %v696 = vpack.c.bf16 %v691, %v690
  %v697 = vpack.c.bf16 %v692, %v692
  %v698 = vld [vmem:[%s20] sm:$0x1]
  %v700 = vlaneseq
  %v701 = vshrl.u32 %v700, 7
  %v702 = vsub.s32 0, %v701
  %v703 = vrot.slane %v698, %v702
  %v706 = vsel %vm485, %v693, 0
  %v709 = vsel %vm108, %v697, 0
  %711 = vmatprep.subr.bf16.mxu0 0
  %712 = vmatpush1.bf16.msra.mxu0 0
  %713 = vmatprep.subr.bf16.mxu0 0
  %714 = vmatpush1.bf16.msra.mxu0 0
  %715 = vmatprep.subr.bf16.mxu0 0
  %716 = vmatpush1.bf16.msra.mxu0 0
  %717 = vmatprep.subr.bf16.mxu0 0
  %718 = vmatpush1.bf16.msra.mxu0 0
  %719 = vmatprep.subr.bf16.mxu0 0
  %720 = vmatpush1.bf16.msra.mxu0 %v709
  %721 = vmatprep.subr.bf16.mxu0 0
  %722 = vmatpush1.bf16.msra.mxu0 %v696
  %723 = vmatprep.subr.bf16.mxu0 0
  %724 = vmatpush1.bf16.msra.mxu0 %v695
  %725 = vmatprep.subr.bf16.mxu0 0
  %726 = vmatpush1.bf16.msra.mxu0 %v694
  %727 = vmatprep.subr.bf16.mxu0 0
  %728 = vmatpush2.bf16.msra.mxu0 0
  %729 = vmatprep.subr.bf16.mxu0 0
  %730 = vmatpush2.bf16.msra.mxu0 0
  %731 = vmatprep.subr.bf16.mxu0 0
  %732 = vmatpush2.bf16.msra.mxu0 0
  %733 = vmatprep.subr.bf16.mxu0 0
  %734 = vmatpush2.bf16.msra.mxu0 0
  %735 = vmatprep.subr.bf16.mxu0 0
  %736 = vmatpush2.bf16.msra.mxu0 0
  %737 = vmatprep.subr.bf16.mxu0 0
  %738 = vmatpush2.bf16.msra.mxu0 0
  %739 = vmatprep.subr.bf16.mxu0 0
  %740 = vmatpush2.bf16.msra.mxu0 0
  %741 = vmatprep.subr.bf16.mxu0 0
  %742 = vmatpush2.bf16.msra.mxu0 0
  %743 = vmatprep.mubr.bf16.mxu0 0
  %744 = vmatmul.mubr.bf16.gmra.mxu0 %v706
  %v745 = vpop.f32.mrf.mxu0
  %v746 = vadd.f32 %v703, %v745
  %v747 = vpop.f32.mrf.mxu0
  %v748 = vpop.f32.mrf.mxu0
  %v749 = vpop.f32.mrf.mxu0
  %750 = vdwg.mxu0
  %v751 = vmul.f32 %v746, 0.01
  %v752 = vmax.f32 %v746, %v751
  %v753 = vld [vmem:[%s21] sm:$0xff]
  %v754 = vld [vmem:[%s21 + $0x8] sm:$0xff]
  %v755 = vld [vmem:[%s21 + $0x10] sm:$0xff]
  %v756 = vld [vmem:[%s21 + $0x18] sm:$0xff]
  %v757 = vld [vmem:[%s21 + $0x20] sm:$0xff]
  %v758 = vld [vmem:[%s21 + $0x28] sm:$0xff]
  %v759 = vld [vmem:[%s21 + $0x30] sm:$0xff]
  %v760 = vld [vmem:[%s21 + $0x38] sm:$0xff]
  %v761 = vld [vmem:[%s21 + $0x40] sm:$0xff]
  %v762 = vld [vmem:[%s21 + $0x48] sm:$0xff]
  %v763 = vld [vmem:[%s21 + $0x50] sm:$0xff]
  %v764 = vld [vmem:[%s21 + $0x58] sm:$0xff]
  %v765 = vld [vmem:[%s21 + $0x60] sm:$0xff]
  %v766 = vld [vmem:[%s21 + $0x68] sm:$0xff]
  %v767 = vld [vmem:[%s21 + $0x70] sm:$0xff]
  %v768 = vld [vmem:[%s21 + $0x78] sm:$0xff]
  %v769 = vld [vmem:[%s21 + $0x80] sm:$0xff]
  %v770 = vld [vmem:[%s21 + $0x88] sm:$0xff]
  %v771 = vld [vmem:[%s21 + $0x90] sm:$0xff]
  %v772 = vld [vmem:[%s21 + $0x98] sm:$0xff]
  %v773 = vld [vmem:[%s21 + $0xa0] sm:$0xff]
  %v774 = vld [vmem:[%s21 + $0xa8] sm:$0xff]
  %v775 = vld [vmem:[%s21 + $0xb0] sm:$0xff]
  %v776 = vld [vmem:[%s21 + $0xb8] sm:$0xff]
  %v777 = vld [vmem:[%s21 + $0xc0] sm:$0xf]
  %v778 = vld [vmem:[%s21 + $0xc8] sm:$0xf]
  %v779 = vpack.c.bf16 %v752, %v752
  %v780 = vpack.c.bf16 %v755, %v753
  %v781 = vpack.c.bf16 %v756, %v754
  %v782 = vpack.c.bf16 %v759, %v757
  %v783 = vpack.c.bf16 %v760, %v758
  %v784 = vpack.c.bf16 %v763, %v761
  %v785 = vpack.c.bf16 %v764, %v762
  %v786 = vpack.c.bf16 %v767, %v765
  %v787 = vpack.c.bf16 %v768, %v766
  %v788 = vpack.c.bf16 %v771, %v769
  %v789 = vpack.c.bf16 %v772, %v770
  %v790 = vpack.c.bf16 %v775, %v773
  %v791 = vpack.c.bf16 %v776, %v774
  %v792 = vpack.c.bf16 %v777, %v777
  %v793 = vpack.c.bf16 %v778, %v778
  %v794 = vld [vmem:[%s22] sm:$0x3]
  %v796 = vlaneseq
  %v797 = vshrl.u32 %v796, 7
  %v798 = vsub.s32 0, %v797
  %v799 = vrot.slane %v794, %v798
  %v800 = vlaneseq
  %v801 = vshrl.u32 %v800, 7
  %v802 = vsub.s32 1, %v801
  %v803 = vrot.slane %v794, %v802
  %v807 = vsel %vm371, %v779, 0
  %v810 = vsel %vm110, %v792, 0
  %v813 = vsel %vm110, %v793, 0
  %815 = vmatprep.subr.bf16.mxu0 0
  %816 = vmatpush1.bf16.msra.mxu0 0
  %817 = vmatprep.subr.bf16.mxu0 %v813
  %818 = vmatpush1.bf16.msra.mxu0 %v810
  %819 = vmatprep.subr.bf16.mxu0 %v791
  %820 = vmatpush1.bf16.msra.mxu0 %v790
  %821 = vmatprep.subr.bf16.mxu0 %v789
  %822 = vmatpush1.bf16.msra.mxu0 %v788
  %823 = vmatprep.subr.bf16.mxu0 %v787
  %824 = vmatpush1.bf16.msra.mxu0 %v786
  %825 = vmatprep.subr.bf16.mxu0 %v785
  %826 = vmatpush1.bf16.msra.mxu0 %v784
  %827 = vmatprep.subr.bf16.mxu0 %v783
  %828 = vmatpush1.bf16.msra.mxu0 %v782
  %829 = vmatprep.subr.bf16.mxu0 %v781
  %830 = vmatpush1.bf16.msra.mxu0 %v780
  %831 = vmatprep.subr.bf16.mxu0 0
  %832 = vmatpush2.bf16.msra.mxu0 0
  %833 = vmatprep.subr.bf16.mxu0 0
  %834 = vmatpush2.bf16.msra.mxu0 0
  %835 = vmatprep.subr.bf16.mxu0 0
  %836 = vmatpush2.bf16.msra.mxu0 0
  %837 = vmatprep.subr.bf16.mxu0 0
  %838 = vmatpush2.bf16.msra.mxu0 0
  %839 = vmatprep.subr.bf16.mxu0 0
  %840 = vmatpush2.bf16.msra.mxu0 0
  %841 = vmatprep.subr.bf16.mxu0 0
  %842 = vmatpush2.bf16.msra.mxu0 0
  %843 = vmatprep.subr.bf16.mxu0 0
  %844 = vmatpush2.bf16.msra.mxu0 0
  %845 = vmatprep.subr.bf16.mxu0 0
  %846 = vmatpush2.bf16.msra.mxu0 0
  %847 = vmatprep.mubr.bf16.mxu0 0
  %848 = vmatmul.mubr.bf16.gmra.mxu0 %v807
  %v849 = vpop.f32.mrf.mxu0
  %v850 = vadd.f32 %v799, %v849
  %v851 = vpop.f32.mrf.mxu0
  %v852 = vadd.f32 %v803, %v851
  %v853 = vpop.f32.mrf.mxu0
  %v854 = vpop.f32.mrf.mxu0
  %855 = vdwg.mxu0
  %v856 = vmul.f32 %v850, 0.01
  %v857 = vmul.f32 %v852, 0.01
  %v858 = vmax.f32 %v850, %v856
  %v859 = vmax.f32 %v852, %v857
  %v860 = vld [vmem:[%s23] sm:$0xff]
  %v861 = vld [vmem:[%s23 + $0x8] sm:$0xff]
  %v862 = vld [vmem:[%s23 + $0x10] sm:$0xff]
  %v863 = vld [vmem:[%s23 + $0x18] sm:$0xff]
  %v864 = vld [vmem:[%s23 + $0x20] sm:$0xff]
  %v865 = vld [vmem:[%s23 + $0x28] sm:$0xff]
  %v866 = vld [vmem:[%s23 + $0x30] sm:$0xff]
  %v867 = vld [vmem:[%s23 + $0x38] sm:$0xff]
  %v868 = vld [vmem:[%s23 + $0x40] sm:$0xff]
  %v869 = vld [vmem:[%s23 + $0x48] sm:$0xff]
  %v870 = vld [vmem:[%s23 + $0x50] sm:$0xff]
  %v871 = vld [vmem:[%s23 + $0x58] sm:$0xff]
  %v872 = vld [vmem:[%s23 + $0x60] sm:$0xff]
  %v873 = vld [vmem:[%s23 + $0x68] sm:$0xff]
  %v874 = vld [vmem:[%s23 + $0x70] sm:$0xff]
  %v875 = vld [vmem:[%s23 + $0x78] sm:$0xff]
  %v876 = vld [vmem:[%s23 + $0x80] sm:$0xff]
  %v877 = vld [vmem:[%s23 + $0x88] sm:$0xff]
  %v878 = vld [vmem:[%s23 + $0x90] sm:$0xff]
  %v879 = vld [vmem:[%s23 + $0x98] sm:$0xff]
  %v880 = vld [vmem:[%s23 + $0xa0] sm:$0xff]
  %v881 = vld [vmem:[%s23 + $0xa8] sm:$0xff]
  %v882 = vld [vmem:[%s23 + $0xb0] sm:$0xff]
  %v883 = vld [vmem:[%s23 + $0xb8] sm:$0xff]
  %v884 = vld [vmem:[%s23 + $0xc0] sm:$0xff]
  %v885 = vpack.c.bf16 %v858, %v858
  %v886 = vpack.c.bf16 %v859, %v859
  %v887 = vpack.c.bf16 %v861, %v860
  %v888 = vpack.c.bf16 %v863, %v862
  %v889 = vpack.c.bf16 %v865, %v864
  %v890 = vpack.c.bf16 %v867, %v866
  %v891 = vpack.c.bf16 %v869, %v868
  %v892 = vpack.c.bf16 %v871, %v870
  %v893 = vpack.c.bf16 %v873, %v872
  %v894 = vpack.c.bf16 %v875, %v874
  %v895 = vpack.c.bf16 %v877, %v876
  %v896 = vpack.c.bf16 %v879, %v878
  %v897 = vpack.c.bf16 %v881, %v880
  %v898 = vpack.c.bf16 %v883, %v882
  %v899 = vpack.c.bf16 %v884, %v884
  %v900 = vld [vmem:[%s24] sm:$0x1]
  %v902 = vlaneseq
  %v903 = vshrl.u32 %v902, 7
  %v904 = vsub.s32 0, %v903
  %v905 = vrot.slane %v900, %v904
  %v908 = vsel %vm196, %v886, 0
  %v911 = vsel %vm114, %v899, 0
  %913 = vmatprep.subr.bf16.mxu0 0
  %914 = vmatpush1.bf16.msra.mxu0 %v894
  %915 = vmatprep.subr.bf16.mxu0 0
  %916 = vmatpush1.bf16.msra.mxu0 %v893
  %917 = vmatprep.subr.bf16.mxu0 0
  %918 = vmatpush1.bf16.msra.mxu0 %v892
  %919 = vmatprep.subr.bf16.mxu0 0
  %920 = vmatpush1.bf16.msra.mxu0 %v891
  %921 = vmatprep.subr.bf16.mxu0 0
  %922 = vmatpush1.bf16.msra.mxu0 %v890
  %923 = vmatprep.subr.bf16.mxu0 0
  %924 = vmatpush1.bf16.msra.mxu0 %v889
  %925 = vmatprep.subr.bf16.mxu0 0
  %926 = vmatpush1.bf16.msra.mxu0 %v888
  %927 = vmatprep.subr.bf16.mxu0 0
  %928 = vmatpush1.bf16.msra.mxu0 %v887
  %929 = vmatprep.subr.bf16.mxu0 0
  %930 = vmatpush2.bf16.msra.mxu0 0
  %931 = vmatprep.subr.bf16.mxu0 0
  %932 = vmatpush2.bf16.msra.mxu0 0
  %933 = vmatprep.subr.bf16.mxu0 0
  %934 = vmatpush2.bf16.msra.mxu0 0
  %935 = vmatprep.subr.bf16.mxu0 0
  %936 = vmatpush2.bf16.msra.mxu0 %v911
  %937 = vmatprep.subr.bf16.mxu0 0
  %938 = vmatpush2.bf16.msra.mxu0 %v898
  %939 = vmatprep.subr.bf16.mxu0 0
  %940 = vmatpush2.bf16.msra.mxu0 %v897
  %941 = vmatprep.subr.bf16.mxu0 0
  %942 = vmatpush2.bf16.msra.mxu0 %v896
  %943 = vmatprep.subr.bf16.mxu0 0
  %944 = vmatpush2.bf16.msra.mxu0 %v895
  %945 = vmatprep.mubr.bf16.mxu0 %v908
  %946 = vmatmul.mubr.bf16.gmra.mxu0 %v885
  %v947 = vpop.f32.mrf.mxu0
  %v948 = vadd.f32 %v905, %v947
  %v949 = vpop.f32.mrf.mxu0
  %v950 = vpop.f32.mrf.mxu0
  %v951 = vpop.f32.mrf.mxu0
  %952 = vdwg.mxu0
  %v953 = vmax.f32 %v948, 0.0
  %v955 = vrot.slane %v953, 1
  %956 = vrot.lane.b32.xlu0 %v955, 16
  %v957 = vpop.permute.xlu0 %956
  %v959 = vrot.slane %v953, 2
  %960 = vrot.lane.b32.xlu0 %v959, 32
  %v961 = vpop.permute.xlu0 %960
  %v963 = vrot.slane %v953, 3
  %964 = vrot.lane.b32.xlu0 %v963, 48
  %v965 = vpop.permute.xlu0 %964
  %v967 = vrot.slane %v953, 4
  %968 = vrot.lane.b32.xlu0 %v967, 64
  %v969 = vpop.permute.xlu0 %968
  %v971 = vrot.slane %v953, 5
  %972 = vrot.lane.b32.xlu0 %v971, 80
  %v973 = vpop.permute.xlu0 %972
  %v975 = vrot.slane %v953, 6
  %976 = vrot.lane.b32.xlu0 %v975, 96
  %v977 = vpop.permute.xlu0 %976
  %v979 = vrot.slane %v953, 7
  %980 = vrot.lane.b32.xlu0 %v979, 112
  %v981 = vpop.permute.xlu0 %980
  %v983 = vsel %vm141, %v953, %v957
  %vm984 = vcmask 261120
  %v985 = vsel %vm984, %v983, %v961
  %vm986 = vcmask 392192
  %v987 = vsel %vm986, %v985, %v965
  %vm988 = vcmask 523264
  %v989 = vsel %vm988, %v987, %v969
  %vm990 = vcmask 654336
  %v991 = vsel %vm990, %v989, %v973
  %vm992 = vcmask 785408
  %v993 = vsel %vm992, %v991, %v977
  %vm994 = vcmask 916480
  %v995 = vsel %vm994, %v993, %v981
  %996 = vst [vmem:[%s25] sm:$0x1] %v995
  // Predicated region
  $region102: #{george_sae_bn_forward.1} parent=0 // pred_check
    _
  $region103: #{george_sae_bn_forward.1} parent=0 // pred_check_branch
    %998 = sbr.rel (0) target = $region105
  $region104: #{george_sae_bn_forward.1} parent=0 // pred_region
    _
  $region105: #{george_sae_bn_forward.1} parent=0 // pred_fallthru
    _
  // Predicated region
  $region106: #{george_sae_bn_forward.1} parent=0 // pred_check
    _
  $region107: #{george_sae_bn_forward.1} parent=0 // pred_check_branch
    %1000 = sbr.rel (0) target = $region109
  $region108: #{george_sae_bn_forward.1} parent=0 // pred_region
    _
  $region109: #{george_sae_bn_forward.1} parent=0 // pred_fallthru
    _

</llo_original>
